<compile_context>
chip_gen: v7x
topology: tpu7x:2x2x1
jax: 0.10.0
libtpu: 0.0.40
codegen_flags: <defaults>
</compile_context>

<pallas_src>
import functools

import jax
import jax.numpy as jnp
from jax.experimental import pallas as pl
from jax.experimental.pallas import tpu as pltpu


def _roundup(a, b):
    return (a + b - 1) // b * b


def _vmem_capacity_bytes():
    try:
        cap = getattr(pltpu.get_tpu_info(), "vmem_capacity_bytes", None)
        if cap:
            return int(cap)
    except Exception:
        pass
    return 64 * 1024 * 1024  # conservative fallback (v7x-sized)


def _conv_bn_relu_kernel(x_ref, w_ref, shift_ref, o_ref, acc_ref, *,
                         kh, stride, th, th_sub, w_out_p, activation):
    """One (batch image, H-tile, C_out-block) grid step.

    x_ref:     (tile_rows_in, W_out_p, kw*C_in)  width-im2col input rows incl. halo (bf16)
    w_ref:     (kh, kw*C_in, tc)                 BN-scale-folded weight (bf16)
    shift_ref: (1, tc)                           folded BN shift (f32)
    o_ref:     (th*W_out_p, tc)                  lane-dense output tile (bf16)
    acc_ref:   (th_sub*W_out_p, tc)              f32 accumulator scratch
    """
    kc = x_ref.shape[-1]
    chunk = th_sub * w_out_p

    for s in range(th // th_sub):                  # static unroll over row chunks
        base = s * th_sub * stride
        for i in range(kh):                        # static unroll over height taps
            if stride == 1:
                xs = x_ref[base + i:base + i + th_sub, :, :]
            else:
                xs = x_ref[pl.ds(base + i, th_sub, stride=stride), :, :]
            part = jnp.dot(xs.reshape(chunk, kc), w_ref[i],
                           preferred_element_type=jnp.float32)
            if i == 0:
                acc_ref[...] = part                # overwrite: no zero-init pass
            else:
                acc_ref[...] += part               # MRB-friendly accumulate (v7x)
        y = acc_ref[...] + shift_ref[...]          # folded-BN shift (scale is in W)
        if activation:
            y = jnp.maximum(y, 0.0)
        o_ref[s * chunk:(s + 1) * chunk, :] = y.astype(o_ref.dtype)


def conv_bn_relu(x, weight, gamma, beta, running_mean, running_var, *,
                 stride=1, padding=1, eps=1e-5, activation=True,
                 target_rows=None, operand_dtype=jnp.bfloat16):
    """x: (N, C_in, H, W) f32 (NCHW, like PyTorch). Returns (N, C_out, H_out, W_out) f32.

    Note: operands (and the output) are bf16 with f32 accumulation — fine for
    inference-level tolerances, not for precision-sensitive paths.
    """
    N, C, H, W = x.shape
    c_out, c_in, kh, kw = weight.shape
    assert c_in == C
    assert stride >= 1 and padding >= 0

    H_out = (H + 2 * padding - kh) // stride + 1
    W_out = (W + 2 * padding - kw) // stride + 1
    assert H_out > 0 and W_out > 0

    # ---- per-generation VMEM handling -----------------------------------------
    vmem_cap = _vmem_capacity_bytes()
    vmem_budget = vmem_cap // 2                              # working-set target
    vmem_limit = max(min(3 * vmem_cap // 4, 100 * 1024 * 1024), 32 * 1024 * 1024)
    if target_rows is None:
        target_rows = 4096 if vmem_cap >= 96 * 1024 * 1024 else 2048

    # ---- layout parameters -----------------------------------------------------
    w_out_p = _roundup(W_out, 8)              # sublane-aligned packed output width
    kc = kw * C                               # matmul K with kw folded in
    c_out_p = _roundup(c_out, 128)            # lane-dense output channels
    tc = 256 if c_out_p % 256 == 0 else 128   # C_out block width (MXU column fill)
    n_c = c_out_p // tc

    # in-kernel row chunk: keeps the live f32 accumulator within the vreg file
    chunk_rows_target = 256 if tc == 128 else 128
    th_sub = max(1, chunk_rows_target // w_out_p)

    # ---- H-tile selection against an honest VMEM working-set estimate ----------
    itm = jnp.dtype(operand_dtype).itemsize
    kc_lane = _roundup(kc, 128)               # lane padding of the K dim in VMEM

    def working_set(t):
        tile_rows_in_ = (t - 1) * stride + kh
        rows = t * w_out_p
        chunk = th_sub * w_out_p
        x_tile = tile_rows_in_ * _roundup(w_out_p, 16) * kc_lane * itm
        o_tile = _roundup(rows, 16) * tc * 2                       # bf16 output tile
        w_tile = kh * _roundup(kc, 16) * tc * itm
        acc = _roundup(chunk, 8) * tc * 4                          # f32 scratch
        tmp = _roundup(chunk, 16) * kc_lane * itm + _roundup(chunk, 8) * tc * 4
        return 2 * (x_tile + o_tile + w_tile) + acc + 2 * tmp + (1 << 16)

    cap_th = _roundup(H_out, th_sub)
    th_goal = max(1, target_rows // w_out_p)
    th = max(th_sub, (min(th_goal, cap_th) // th_sub) * th_sub)
    while th > th_sub and working_set(th) > vmem_budget:
        th -= th_sub

    n_h = pl.cdiv(H_out, th)
    tile_rows_in = (th - 1) * stride + kh

    # ---- host-side packing ------------------------------------------------------
    hp_needed = (n_h * th - 1) * stride + kh
    bot_pad = max(hp_needed - H - padding, 0)
    x_nhwc = jnp.transpose(x, (0, 2, 3, 1)).astype(operand_dtype)
    x_pad = jnp.pad(x_nhwc, ((0, 0), (padding, bot_pad), (padding, padding), (0, 0)))
    # width-only im2col: (N, Hp, W_out, kw*C_in); then pad W_out -> w_out_p
    cols = [x_pad[:, :, j:j + (W_out - 1) * stride + 1:stride, :] for j in range(kw)]
    xw = jnp.concatenate(cols, axis=-1)
    if w_out_p > W_out:
        xw = jnp.pad(xw, ((0, 0), (0, 0), (0, w_out_p - W_out), (0, 0)))
    # non-overlapping per-tile blocks that already include the halo rows
    x_tiles = jnp.stack(
        [xw[:, t * th * stride:t * th * stride + tile_rows_in] for t in range(n_h)],
        axis=1)                                # (N, n_h, tile_rows_in, w_out_p, kc)

    # ---- fold BN into the weights / shift (host side, f32) ----------------------
    inv = gamma * jax.lax.rsqrt(running_var + eps)
    w_fold = weight.astype(jnp.float32) * inv[:, None, None, None]   # scale -> W
    w_t = jnp.transpose(w_fold, (2, 3, 1, 0)).reshape(kh, kc, c_out)  # (kh, kw*C, c_out)
    w_t = jnp.pad(w_t, ((0, 0), (0, 0), (0, c_out_p - c_out))).astype(operand_dtype)
    shift = jnp.pad(beta - running_mean * inv, (0, c_out_p - c_out))
    shift = shift.reshape(1, c_out_p).astype(jnp.float32)

    kernel = functools.partial(_conv_bn_relu_kernel, kh=kh, stride=stride, th=th,
                               th_sub=th_sub, w_out_p=w_out_p, activation=activation)

    out = pl.pallas_call(
        kernel,
        out_shape=jax.ShapeDtypeStruct((N, n_h * th * w_out_p, c_out_p), jnp.bfloat16),
        grid_spec=pltpu.PrefetchScalarGridSpec(
            num_scalar_prefetch=0,
            grid=(N, n_h, n_c),
            in_specs=[
                # whole H-tile (incl. halo) in one block — no in-kernel concat
                pl.BlockSpec((None, None, tile_rows_in, w_out_p, kc),
                             lambda n, h, c: (n, h, 0, 0, 0)),
                # BN-folded weight, one C_out block, resident across (n, h)
                pl.BlockSpec((kh, kc, tc), lambda n, h, c: (0, 0, c)),
                pl.BlockSpec((1, tc), lambda n, h, c: (0, c)),
            ],
            out_specs=pl.BlockSpec((None, th * w_out_p, tc),
                                   lambda n, h, c: (n, h, c)),
            scratch_shapes=[pltpu.VMEM((th_sub * w_out_p, tc), jnp.float32)],
        ),
        compiler_params=pltpu.CompilerParams(
            dimension_semantics=("parallel", "parallel", "parallel"),
            vmem_limit_bytes=vmem_limit),
    )(x_tiles, w_t, shift)

    # (N, n_h*th*w_out_p, c_out_p) -> crop padding -> NCHW f32
    out = out.reshape(N, n_h * th, w_out_p, c_out_p)[:, :H_out, :W_out, :c_out]
    return jnp.transpose(out, (0, 3, 1, 2)).astype(x.dtype)


def _reference(x, weight, gamma, beta, mean, var, *, stride, padding, eps, activation):
    y = jax.lax.conv_general_dilated(
        x, weight, window_strides=(stride, stride),
        padding=[(padding, padding), (padding, padding)],
        dimension_numbers=("NCHW", "OIHW", "NCHW"))
    inv = gamma * jax.lax.rsqrt(var + eps)
    y = y * inv.reshape(1, -1, 1, 1) + (beta - mean * inv).reshape(1, -1, 1, 1)
    if activation:
        y = jnp.maximum(y, 0.0)
    return y


if __name__ == "__main__":
    key = jax.random.PRNGKey(0)
    kx, kw_, kg, kb, km, kv, kx2 = jax.random.split(key, 7)

    # ConvBNReLU(c_in=4, c_out=8, kernel_size=3), small shapes
    N, C_in, H, W = 2, 4, 16, 16
    C_out, ksz = 8, 3

    x = jax.random.normal(kx, (N, C_in, H, W), dtype=jnp.float32)
    weight = 0.1 * jax.random.normal(kw_, (C_out, C_in, ksz, ksz), dtype=jnp.float32)
    gamma = 1.0 + 0.05 * jax.random.normal(kg, (C_out,), dtype=jnp.float32)
    beta = 0.05 * jax.random.normal(kb, (C_out,), dtype=jnp.float32)
    running_mean = 0.1 * jax.random.normal(km, (C_out,), dtype=jnp.float32)
    running_var = 1.0 + 0.1 * jax.random.uniform(kv, (C_out,), dtype=jnp.float32)

    out = conv_bn_relu(x, weight, gamma, beta, running_mean, running_var,
                       stride=1, padding=1, activation=True)
    out = jax.block_until_ready(out)
    assert out.shape == (N, C_out, H, W), out.shape
    ref = _reference(x, weight, gamma, beta, running_mean, running_var,
                     stride=1, padding=1, eps=1e-5, activation=True)
    err = float(jnp.max(jnp.abs(out - ref)))
    assert err < 5e-2, f"mismatch vs reference: max abs err {err}"

    # second config: exercises multiple H-tiles (halo rows packed per tile) and
    # the H_out-padding / crop path.
    x2 = jax.random.normal(kx2, (1, C_in, 20, 16), dtype=jnp.float32)
    out2 = conv_bn_relu(x2, weight, gamma, beta, running_mean, running_var,
                        stride=1, padding=1, activation=True, target_rows=128)
    out2 = jax.block_until_ready(out2)
    assert out2.shape == (1, C_out, 20, 16), out2.shape
    ref2 = _reference(x2, weight, gamma, beta, running_mean, running_var,
                      stride=1, padding=1, eps=1e-5, activation=True)
    err2 = float(jnp.max(jnp.abs(out2 - ref2)))
    assert err2 < 5e-2, f"mismatch vs reference (tiled): max abs err {err2}"

    print("KERNEL_OK")
</pallas_src>

<mosaic_0001>
module attributes {stable_mosaic.version = 11 : i64} {
  func.func @_conv_bn_relu_kernel(%arg0: i32, %arg1: i32, %arg2: i32, %arg3: memref<1x1x18x16x12xbf16, #tpu.memory_space<vmem>>, %arg4: memref<3x12x128xbf16, #tpu.memory_space<vmem>>, %arg5: memref<1x128xf32, #tpu.memory_space<vmem>>, %arg6: memref<1x256x128xbf16, #tpu.memory_space<vmem>>, %arg7: memref<256x128xf32, #tpu.memory_space<vmem>>) attributes {dimension_semantics = [#tpu.dimension_semantics<parallel>, #tpu.dimension_semantics<parallel>, #tpu.dimension_semantics<parallel>], iteration_bounds = array<i64: 2, 1, 1>, scalar_prefetch = 0 : i64, scratch_operands = 1 : i64, tpu.core_type = #tpu.core_type<tc>, window_params = [{transform_indices = @transform_0, window_bounds = array<i64: 1, 1, 18, 16, 12>}, {transform_indices = @transform_1, window_bounds = array<i64: 3, 12, 128>}, {transform_indices = @transform_2, window_bounds = array<i64: 1, 128>}, {transform_indices = @transform_3, window_bounds = array<i64: 1, 256, 128>}]} {
    %c0 = arith.constant 0 : index
    %c0_0 = arith.constant 0 : index
    %c0_1 = arith.constant 0 : index
    %c0_2 = arith.constant 0 : index
    %c0_3 = arith.constant 0 : index
    %0 = vector.load %arg3[%c0, %c0_0, %c0_1, %c0_2, %c0_3] : memref<1x1x18x16x12xbf16, #tpu.memory_space<vmem>>, vector<1x1x16x16x12xbf16>
    %1 = vector.shape_cast %0 : vector<1x1x16x16x12xbf16> to vector<16x16x12xbf16>
    %2 = vector.shape_cast %1 : vector<16x16x12xbf16> to vector<256x12xbf16>
    %c0_4 = arith.constant 0 : index
    %c0_5 = arith.constant 0 : index
    %c0_6 = arith.constant 0 : index
    %3 = vector.load %arg4[%c0_4, %c0_5, %c0_6] : memref<3x12x128xbf16, #tpu.memory_space<vmem>>, vector<1x12x128xbf16>
    %4 = vector.shape_cast %3 : vector<1x12x128xbf16> to vector<12x128xbf16>
    %cst = arith.constant dense<0.000000e+00> : vector<256x128xf32>
    %5 = tpu.matmul %2, %4, %cst {dimension_numbers = #tpu.dot_dimension_numbers<[1], [0], [0], [1], [0, 0, 1, 1], [], []>} : vector<256x12xbf16>, vector<12x128xbf16>, vector<256x128xf32> -> vector<256x128xf32>
    %c0_7 = arith.constant 0 : index
    %c0_8 = arith.constant 0 : index
    %6 = vector.load %arg7[%c0_7, %c0_8] : memref<256x128xf32, #tpu.memory_space<vmem>>, vector<256x128xf32>
    tpu.vector_store %arg7[%c0_7, %c0_8], %5 {strides = array<i32>} : memref<256x128xf32, #tpu.memory_space<vmem>>, vector<256x128xf32>,
    %c0_9 = arith.constant 0 : index
    %c0_10 = arith.constant 0 : index
    %c1 = arith.constant 1 : index
    %c0_11 = arith.constant 0 : index
    %c0_12 = arith.constant 0 : index
    %7 = vector.load %arg3[%c0_9, %c0_10, %c1, %c0_11, %c0_12] : memref<1x1x18x16x12xbf16, #tpu.memory_space<vmem>>, vector<1x1x16x16x12xbf16>
    %8 = vector.shape_cast %7 : vector<1x1x16x16x12xbf16> to vector<16x16x12xbf16>
    %9 = vector.shape_cast %8 : vector<16x16x12xbf16> to vector<256x12xbf16>
    %c1_13 = arith.constant 1 : index
    %c0_14 = arith.constant 0 : index
    %c0_15 = arith.constant 0 : index
    %10 = vector.load %arg4[%c1_13, %c0_14, %c0_15] : memref<3x12x128xbf16, #tpu.memory_space<vmem>>, vector<1x12x128xbf16>
    %11 = vector.shape_cast %10 : vector<1x12x128xbf16> to vector<12x128xbf16>
    %cst_16 = arith.constant dense<0.000000e+00> : vector<256x128xf32>
    %12 = tpu.matmul %9, %11, %cst_16 {dimension_numbers = #tpu.dot_dimension_numbers<[1], [0], [0], [1], [0, 0, 1, 1], [], []>} : vector<256x12xbf16>, vector<12x128xbf16>, vector<256x128xf32> -> vector<256x128xf32>
    %c0_17 = arith.constant 0 : index
    %c0_18 = arith.constant 0 : index
    %13 = vector.load %arg7[%c0_17, %c0_18] : memref<256x128xf32, #tpu.memory_space<vmem>>, vector<256x128xf32>
    %14 = arith.addf %13, %12 : vector<256x128xf32>
    %c0_19 = arith.constant 0 : index
    %c0_20 = arith.constant 0 : index
    %15 = vector.load %arg7[%c0_19, %c0_20] : memref<256x128xf32, #tpu.memory_space<vmem>>, vector<256x128xf32>
    tpu.vector_store %arg7[%c0_19, %c0_20], %14 {strides = array<i32>} : memref<256x128xf32, #tpu.memory_space<vmem>>, vector<256x128xf32>,
    %c0_21 = arith.constant 0 : index
    %c0_22 = arith.constant 0 : index
    %c2 = arith.constant 2 : index
    %c0_23 = arith.constant 0 : index
    %c0_24 = arith.constant 0 : index
    %16 = vector.load %arg3[%c0_21, %c0_22, %c2, %c0_23, %c0_24] : memref<1x1x18x16x12xbf16, #tpu.memory_space<vmem>>, vector<1x1x16x16x12xbf16>
    %17 = vector.shape_cast %16 : vector<1x1x16x16x12xbf16> to vector<16x16x12xbf16>
    %18 = vector.shape_cast %17 : vector<16x16x12xbf16> to vector<256x12xbf16>
    %c2_25 = arith.constant 2 : index
    %c0_26 = arith.constant 0 : index
    %c0_27 = arith.constant 0 : index
    %19 = vector.load %arg4[%c2_25, %c0_26, %c0_27] : memref<3x12x128xbf16, #tpu.memory_space<vmem>>, vector<1x12x128xbf16>
    %20 = vector.shape_cast %19 : vector<1x12x128xbf16> to vector<12x128xbf16>
    %cst_28 = arith.constant dense<0.000000e+00> : vector<256x128xf32>
    %21 = tpu.matmul %18, %20, %cst_28 {dimension_numbers = #tpu.dot_dimension_numbers<[1], [0], [0], [1], [0, 0, 1, 1], [], []>} : vector<256x12xbf16>, vector<12x128xbf16>, vector<256x128xf32> -> vector<256x128xf32>
    %c0_29 = arith.constant 0 : index
    %c0_30 = arith.constant 0 : index
    %22 = vector.load %arg7[%c0_29, %c0_30] : memref<256x128xf32, #tpu.memory_space<vmem>>, vector<256x128xf32>
    %23 = arith.addf %22, %21 : vector<256x128xf32>
    %c0_31 = arith.constant 0 : index
    %c0_32 = arith.constant 0 : index
    %24 = vector.load %arg7[%c0_31, %c0_32] : memref<256x128xf32, #tpu.memory_space<vmem>>, vector<256x128xf32>
    tpu.vector_store %arg7[%c0_31, %c0_32], %23 {strides = array<i32>} : memref<256x128xf32, #tpu.memory_space<vmem>>, vector<256x128xf32>,
    %c0_33 = arith.constant 0 : index
    %c0_34 = arith.constant 0 : index
    %25 = vector.load %arg7[%c0_33, %c0_34] : memref<256x128xf32, #tpu.memory_space<vmem>>, vector<256x128xf32>
    %c0_35 = arith.constant 0 : index
    %c0_36 = arith.constant 0 : index
    %26 = vector.load %arg5[%c0_35, %c0_36] : memref<1x128xf32, #tpu.memory_space<vmem>>, vector<1x128xf32>
    %27 = vector.broadcast %26 : vector<1x128xf32> to vector<256x128xf32>
    %28 = arith.addf %25, %27 : vector<256x128xf32>
    %cst_37 = arith.constant 0.000000e+00 : f32
    %29 = vector.broadcast %cst_37 : f32 to vector<256x128xf32>
    %30 = arith.maximumf %28, %29 : vector<256x128xf32>
    %31 = arith.truncf %30 : vector<256x128xf32> to vector<256x128xbf16>
    %c0_38 = arith.constant 0 : index
    %c0_39 = arith.constant 0 : index
    %c0_40 = arith.constant 0 : index
    %32 = vector.load %arg6[%c0_38, %c0_39, %c0_40] : memref<1x256x128xbf16, #tpu.memory_space<vmem>>, vector<1x256x128xbf16>
    %33 = vector.shape_cast %32 : vector<1x256x128xbf16> to vector<256x128xbf16>
    %34 = vector.shape_cast %31 : vector<256x128xbf16> to vector<1x256x128xbf16>
    tpu.vector_store %arg6[%c0_38, %c0_39, %c0_40], %34 {strides = array<i32>} : memref<1x256x128xbf16, #tpu.memory_space<vmem>>, vector<1x256x128xbf16>,
    return
  }
  func.func @transform_0(%arg0: i32, %arg1: i32, %arg2: i32) -> (i32, i32, i32, i32, i32) {
    %c0_i32 = arith.constant 0 : i32
    %c0_i32_0 = arith.constant 0 : i32
    %c0_i32_1 = arith.constant 0 : i32
    %c0_i32_2 = arith.constant 0 : i32
    return %arg0, %arg1, %c0_i32, %c0_i32_0, %c0_i32_1 : i32, i32, i32, i32, i32
  }
  func.func @transform_1(%arg0: i32, %arg1: i32, %arg2: i32) -> (i32, i32, i32) {
    %c0_i32 = arith.constant 0 : i32
    %c0_i32_0 = arith.constant 0 : i32
    %c0_i32_1 = arith.constant 0 : i32
    return %c0_i32, %c0_i32_0, %arg2 : i32, i32, i32
  }
  func.func @transform_2(%arg0: i32, %arg1: i32, %arg2: i32) -> (i32, i32) {
    %c0_i32 = arith.constant 0 : i32
    %c0_i32_0 = arith.constant 0 : i32
    return %c0_i32, %arg2 : i32, i32
  }
  func.func @transform_3(%arg0: i32, %arg1: i32, %arg2: i32) -> (i32, i32, i32) {
    %c0_i32 = arith.constant 0 : i32
    return %arg0, %arg1, %arg2 : i32, i32, i32
  }
}

</mosaic_0001>

<llo_original>
// kernel: tpu_custom_call.1
$region0: #{tpu_custom_call.1}
  #allocation0 [shape = 'u32[]', space=smem, size = 0x4, offset = 0x4, fixed_abs, tag = 'smem constant byte address 0x4 - core index']
  #allocation1 [shape = 'u32[144,128]{1,0:T(1,128)}', space=vmem, size = 0x12000, scoped, tag = 'internal scratch']
  #allocation2 [shape = 'f32[256,128]{1,0:T(8,128)}', space=vmem, size = 0x20000, scoped, tag = 'scratch operand']
  %s0 = inlined_call_operand.vmem [shape: bf16[2,1,18,16,12], index: 0, kind: input, shape index: {}]
  %s1 = inlined_call_operand.vmem [shape: bf16[3,12,128], index: 1, kind: input, shape index: {}]
  %s2 = inlined_call_operand.vmem [shape: f32[1,128], index: 2, kind: input, shape index: {}]
  %s3 = inlined_call_operand.hbm [shape: bf16[2,256,128], index: 3, kind: output, shape index: {}]
  %s4 = sld [smem:[#allocation0]]
  $region45: #{tpu_custom_call.1} parent=0
    _
  %s6 = ssub.s32 1, %s4
  %s7 = scalar_select 0, %s6, %s4
  $region1: #{tpu_custom_call.1} parent=0
    #allocation3 [shape = 'u8[131072]{0}', space=vmem, size = 0x20000, scoped, tag = 'output window, operand 0']
    #allocation4 [shape = 's32[2]{0}', space=sflag, size = 0x8, scoped, tag = 'scoped memory for tpu_custom_call.1']
    %8 = vsyncpa [#allocation4], 0
    %s9 = scalar_lea.sflag [#allocation4], 1
    %10 = vsyncpa %s9, 0
    loop: start=0, step=1, limit=4
    $region2: #{tpu_custom_call.1} parent=1 // loop_pre_header
      _
    $region3: #{tpu_custom_call.1} parent=1 // loop_header
      %s12 = sphi 0, %s16
      %p13 = scmp.ge.s32.totalorder %s12, 4
      %s19 = sphi 0, %s38
      %s20 = sphi 0, %s34
      %s21 = sphi 0, %s30
      %s22 = sphi 0, %s19
      %s23 = sphi 0, %s20
      %s24 = sphi 0, %s21
      %s25 = sphi 0, %s22
      %s26 = sphi 0, %s23
      %s27 = sphi 0, %s24
      %s43 = sphi 0, %s45
      %s46 = sphi 0, %s43
      %s47 = sphi 0, %s46
      %s63 = sphi 0, %s47
      %s69 = sphi 0, %s71
      %s72 = sphi 0, %s69
      %s73 = sphi 0, %s72
      %s89 = sphi 0, %s73
      %s95 = sphi 0, %s97
      %s98 = sphi 0, %s95
      %s99 = sphi 0, %s98
      %s115 = sphi 0, %s99
      %s125 = sphi 0, %s127
      %s128 = sphi 0, %s125
      %s129 = sphi 0, %s128
      %s145 = sphi 0, %s129
    $region4: #{tpu_custom_call.1} parent=1 // loop_header_branch
      %15 = sbr.rel (%p13) target = $region8
    $region5: #{tpu_custom_call.1} parent=1 // loop_body
      %s17 = ssub.s32 %s12, 1
      %s18 = ssub.s32 %s12, 2
      %s28 = sadd.s32 1, %s21
      %p29 = scmp.ge.s32.totalorder %s28, 1
      %s30 = scalar_select %p29, 0, %s28
      %s31 = sadd.s32 1, %s20
      %s32 = scalar_select %p29, %s31, %s20
      %p33 = scmp.ge.s32.totalorder %s32, 1
      %s34 = scalar_select %p33, 0, %s32
      %s35 = sadd.s32 1, %s19
      %s36 = scalar_select %p33, %s35, %s19
      %p37 = scmp.ge.s32.totalorder %s36, 2
      %s38 = scalar_select %p37, 0, %s36
      %s39 = ssub.s32 %s19, %s38
      %s40 = ssub.s32 %s20, %s34
      %s41 = sor.u32 %s39, %s40
      %p42 = scmp.eq.s32.totalorder %s41, 0
      %s44 = sadd.s32 %s43, 1
      %s45 = scalar_select %p42, %s43, %s44
      %p48 = pneg %p42
      %p49 = scmp.eq.s32.totalorder %s12, 1
      %p50 = por %p48, %p49
      %p51 = scmp.ne.s32.totalorder %s43, %s46
      %p52 = scmp.eq.s32.totalorder %s12, 0
      %p53 = por %p51, %p52
      %p54 = scmp.ne.s32.totalorder %s43, %s46
      %p55 = scmp.eq.s32.totalorder %s17, 1
      %p56 = por %p54, %p55
      %p57 = scmp.ne.s32.totalorder %s46, %s47
      %p58 = scmp.eq.s32.totalorder %s17, 0
      %p59 = por %p57, %p58
      %p60 = scmp.ne.s32.totalorder %s46, %s47
      %p61 = scmp.eq.s32.totalorder %s18, 1
      %p62 = por %p60, %p61
      %p64 = scmp.ne.s32.totalorder %s47, %s63
      %p65 = scmp.eq.s32.totalorder %s18, 0
      %p66 = por %p64, %p65
      %s67 = ssub.s32 %s21, %s30
      %p68 = scmp.eq.s32.totalorder %s67, 0
      %s70 = sadd.s32 %s69, 1
      %s71 = scalar_select %p68, %s69, %s70
      %p74 = pneg %p68
      %p75 = scmp.eq.s32.totalorder %s12, 1
      %p76 = por %p74, %p75
      %p77 = scmp.ne.s32.totalorder %s69, %s72
      %p78 = scmp.eq.s32.totalorder %s12, 0
      %p79 = por %p77, %p78
      %p80 = scmp.ne.s32.totalorder %s69, %s72
      %p81 = scmp.eq.s32.totalorder %s17, 1
      %p82 = por %p80, %p81
      %p83 = scmp.ne.s32.totalorder %s72, %s73
      %p84 = scmp.eq.s32.totalorder %s17, 0
      %p85 = por %p83, %p84
      %p86 = scmp.ne.s32.totalorder %s72, %s73
      %p87 = scmp.eq.s32.totalorder %s18, 1
      %p88 = por %p86, %p87
      %p90 = scmp.ne.s32.totalorder %s73, %s89
      %p91 = scmp.eq.s32.totalorder %s18, 0
      %p92 = por %p90, %p91
      %s93 = ssub.s32 %s21, %s30
      %p94 = scmp.eq.s32.totalorder %s93, 0
      %s96 = sadd.s32 %s95, 1
      %s97 = scalar_select %p94, %s95, %s96
      %p100 = pneg %p94
      %p101 = scmp.eq.s32.totalorder %s12, 1
      %p102 = por %p100, %p101
      %p103 = scmp.ne.s32.totalorder %s95, %s98
      %p104 = scmp.eq.s32.totalorder %s12, 0
      %p105 = por %p103, %p104
      %p106 = scmp.ne.s32.totalorder %s95, %s98
      %p107 = scmp.eq.s32.totalorder %s17, 1
      %p108 = por %p106, %p107
      %p109 = scmp.ne.s32.totalorder %s98, %s99
      %p110 = scmp.eq.s32.totalorder %s17, 0
      %p111 = por %p109, %p110
      %p112 = scmp.ne.s32.totalorder %s98, %s99
      %p113 = scmp.eq.s32.totalorder %s18, 1
      %p114 = por %p112, %p113
      %p116 = scmp.ne.s32.totalorder %s99, %s115
      %p117 = scmp.eq.s32.totalorder %s18, 0
      %p118 = por %p116, %p117
      %s119 = ssub.s32 %s19, %s38
      %s120 = ssub.s32 %s20, %s34
      %s121 = sor.u32 %s119, %s120
      %s122 = ssub.s32 %s21, %s30
      %s123 = sor.u32 %s121, %s122
      %p124 = scmp.eq.s32.totalorder %s123, 0
      %s126 = sadd.s32 %s125, 1
      %s127 = scalar_select %p124, %s125, %s126
      %p130 = pneg %p124
      %p131 = scmp.eq.s32.totalorder %s12, 1
      %p132 = por %p130, %p131
      %p133 = scmp.ne.s32.totalorder %s125, %s128
      %p134 = scmp.eq.s32.totalorder %s12, 0
      %p135 = por %p133, %p134
      %p136 = scmp.ne.s32.totalorder %s125, %s128
      %p137 = scmp.eq.s32.totalorder %s17, 1
      %p138 = por %p136, %p137
      %p139 = scmp.ne.s32.totalorder %s128, %s129
      %p140 = scmp.eq.s32.totalorder %s17, 0
      %p141 = por %p139, %p140
      %p142 = scmp.ne.s32.totalorder %s128, %s129
      %p143 = scmp.eq.s32.totalorder %s18, 1
      %p144 = por %p142, %p143
      %p146 = scmp.ne.s32.totalorder %s129, %s145
      %p147 = scmp.eq.s32.totalorder %s18, 0
      %p148 = por %p146, %p147
      %p149 = scmp.le.s32.totalorder 1, %s12
      %p150 = scmp.lt.s32.totalorder %s12, 3
      %p151 = pnand %p149, %p150
      %p152 = pneg %p151
      // Predicated region
      $region9: #{tpu_custom_call.1} parent=5 // pred_check
        _
      $region10: #{tpu_custom_call.1} parent=5 // pred_check_branch
        %154 = sbr.rel (%p151) target = $region12
      $region11: #{tpu_custom_call.1} parent=5 // pred_region
        %s155 = ssub.s32 %s12, 1
        // Predicated region
        $region13: #{tpu_custom_call.1} parent=11 // pred_check
          %p156 = pneg %p85
        $region14: #{tpu_custom_call.1} parent=11 // pred_check_branch
          %158 = sbr.rel (%p156) target = $region16
        $region15: #{tpu_custom_call.1} parent=11 // pred_region
          %p159 = scmp.lt.s32.totalorder %s24, 0
          %s160 = scalar_select %p159, %s24, 0
          %s161 = smul.addr %s160, 4
          %s162 = scalar_lea.vmem %s1, %s161
        $region16: #{tpu_custom_call.1} parent=11 // pred_fallthru
          _
        // Predicated region
        $region17: #{tpu_custom_call.1} parent=11 // pred_check
          %p163 = pneg %p111
        $region18: #{tpu_custom_call.1} parent=11 // pred_check_branch
          %165 = sbr.rel (%p163) target = $region20
        $region19: #{tpu_custom_call.1} parent=11 // pred_region
          %p166 = scmp.lt.s32.totalorder %s24, 0
          %s167 = scalar_select %p166, %s24, 0
          %s168 = scalar_lea.vmem %s2, %s167
        $region20: #{tpu_custom_call.1} parent=11 // pred_fallthru
          _
      $region12: #{tpu_custom_call.1} parent=5 // pred_fallthru
        _
      %p169 = scmp.lt.s32.totalorder %s12, 2
      // Predicated region
      $region21: #{tpu_custom_call.1} parent=5 // pred_check
        %p170 = pneg %p169
      $region22: #{tpu_custom_call.1} parent=5 // pred_check_branch
        %172 = sbr.rel (%p170) target = $region24
      $region23: #{tpu_custom_call.1} parent=5 // pred_region
        // Predicated region
        $region25: #{tpu_custom_call.1} parent=23 // pred_check
          %p173 = pneg %p53
        $region26: #{tpu_custom_call.1} parent=23 // pred_check_branch
          %175 = sbr.rel (%p173) target = $region28
        $region27: #{tpu_custom_call.1} parent=23 // pred_region
          %p176 = scmp.lt.s32.totalorder %s19, 1
          %s177 = scalar_select %p176, %s19, 1
          %p178 = scmp.lt.s32.totalorder %s20, 0
          %s179 = scalar_select %p178, %s20, 0
          %s180 = smul.addr %s179, 36
          %s181 = smul.addr %s177, 36
          %s182 = sadd.s32 %s180, %s181
          %s183 = smul.addr %s182, 4
          %s184 = scalar_lea.vmem %s0, %s183
        $region28: #{tpu_custom_call.1} parent=23 // pred_fallthru
          _
      $region24: #{tpu_custom_call.1} parent=5 // pred_fallthru
        _
      %p185 = scmp.le.s32.totalorder 1, %s12
      %p186 = scmp.lt.s32.totalorder %s12, 3
      %p187 = pnand %p185, %p186
      %p188 = pneg %p187
      // Predicated region
      $region29: #{tpu_custom_call.1} parent=5 // pred_check
        _
      $region30: #{tpu_custom_call.1} parent=5 // pred_check_branch
        %190 = sbr.rel (%p187) target = $region32
      $region31: #{tpu_custom_call.1} parent=5 // pred_region
        %s191 = ssub.s32 %s12, 1
        %p192 = scmp.lt.s32.totalorder %s22, 1
        %s193 = scalar_select %p192, %s22, 1
        %p194 = scmp.lt.s32.totalorder %s23, 0
        %s195 = scalar_select %p194, %s23, 0
        %s196 = smul.addr %s195, 36
        %s197 = smul.addr %s193, 36
        %s198 = sadd.s32 %s196, %s197
        %s199 = smul.addr %s198, 4
        %s200 = scalar_lea.vmem %s0, %s199
        %p201 = pneg %p59
        %p202 = pneg %p56
        %p203 = scmp.lt.s32.totalorder %s24, 0
        %s204 = scalar_select %p203, %s24, 0
        %s205 = smul.addr %s204, 4
        %s206 = scalar_lea.vmem %s1, %s205
        %p207 = pneg %p85
        %p208 = pneg %p82
        %p209 = scmp.lt.s32.totalorder %s24, 0
        %s210 = scalar_select %p209, %s24, 0
        %s211 = scalar_lea.vmem %s2, %s210
        %p212 = pneg %p111
        %p213 = pneg %p108
        %p214 = pneg %p141
        %p215 = pneg %p138
        %s216 = sand.u32 %s128, 1
        %s217 = scalar_lea.sflag [#allocation4], %s216
        %s218 = sand.u32 %s128, 1
        %s219 = smul.addr %s218, 128
        %s220 = scalar_lea.vmem [#allocation3], %s219
        %p221 = scmp.lt.s32.totalorder %s22, 1
        %s222 = scalar_select %p221, %s22, 1
        %p223 = scmp.lt.s32.totalorder %s23, 0
        %s224 = scalar_select %p223, %s23, 0
        %s225 = smul.addr %s224, 36
        %s226 = smul.addr %s222, 36
        %s227 = sadd.s32 %s225, %s226
        %s228 = smul.addr %s227, 4
        %s229 = scalar_lea.vmem %s0, %s228
        %p230 = scmp.lt.s32.totalorder %s24, 0
        %s231 = scalar_select %p230, %s24, 0
        %s232 = smul.addr %s231, 4
        %s233 = scalar_lea.vmem %s1, %s232
        %p234 = scmp.lt.s32.totalorder %s24, 0
        %s235 = scalar_select %p234, %s24, 0
        %s236 = scalar_lea.vmem %s2, %s235
        %s237 = smul.u32 32, %s23
        %v239 = vld [vmem:[%s229] sm:$0xf]
        %v240 = vld [vmem:[%s229 + $0x4] sm:$0xf]
        %v241 = vld [vmem:[%s229 + $0x8] sm:$0xf]
        %v242 = vld [vmem:[%s229 + $0xc] sm:$0xf]
        %v243 = vld [vmem:[%s229 + $0x10] sm:$0xf]
        %v244 = vld [vmem:[%s229 + $0x14] sm:$0xf]
        %v245 = vld [vmem:[%s229 + $0x18] sm:$0xf]
        %v246 = vld [vmem:[%s229 + $0x1c] sm:$0xf]
        %v247 = vld [vmem:[%s229 + $0x20] sm:$0xf]
        %v248 = vld [vmem:[%s229 + $0x24] sm:$0xf]
        %v249 = vld [vmem:[%s229 + $0x28] sm:$0xf]
        %v250 = vld [vmem:[%s229 + $0x2c] sm:$0xf]
        %v251 = vld [vmem:[%s229 + $0x30] sm:$0xf]
        %v252 = vld [vmem:[%s229 + $0x34] sm:$0xf]
        %v253 = vld [vmem:[%s229 + $0x38] sm:$0xf]
        %v254 = vld [vmem:[%s229 + $0x3c] sm:$0xf]
        %v255 = vld [vmem:[%s229 + $0x40] sm:$0xf]
        %v256 = vld [vmem:[%s229 + $0x44] sm:$0xf]
        %v257 = vld [vmem:[%s229 + $0x48] sm:$0xf]
        %v258 = vld [vmem:[%s229 + $0x4c] sm:$0xf]
        %v259 = vld [vmem:[%s229 + $0x50] sm:$0xf]
        %v260 = vld [vmem:[%s229 + $0x54] sm:$0xf]
        %v261 = vld [vmem:[%s229 + $0x58] sm:$0xf]
        %v262 = vld [vmem:[%s229 + $0x5c] sm:$0xf]
        %v263 = vld [vmem:[%s229 + $0x60] sm:$0xf]
        %v264 = vld [vmem:[%s229 + $0x64] sm:$0xf]
        %v265 = vld [vmem:[%s229 + $0x68] sm:$0xf]
        %v266 = vld [vmem:[%s229 + $0x6c] sm:$0xf]
        %v267 = vld [vmem:[%s229 + $0x70] sm:$0xf]
        %v268 = vld [vmem:[%s229 + $0x74] sm:$0xf]
        %v269 = vld [vmem:[%s229 + $0x78] sm:$0xf]
        %v270 = vld [vmem:[%s229 + $0x7c] sm:$0xf]
        %v271 = vld [vmem:[%s233] sm:$0xf]
        %v272 = vld [vmem:[%s233 + $0x4] sm:$0x3]
        %v305 = vunpack.c.l.b16 %v239
        %v306 = vunpack.c.l.b16 %v240
        %v307 = vunpack.c.l.b16 %v241
        %v308 = vunpack.c.l.b16 %v242
        %v309 = vunpack.c.l.b16 %v243
        %v310 = vunpack.c.l.b16 %v244
        %v311 = vunpack.c.l.b16 %v245
        %v312 = vunpack.c.l.b16 %v246
        %v313 = vunpack.c.l.b16 %v247
        %v314 = vunpack.c.l.b16 %v248
        %v315 = vunpack.c.l.b16 %v249
        %v316 = vunpack.c.l.b16 %v250
        %v317 = vunpack.c.l.b16 %v251
        %v318 = vunpack.c.l.b16 %v252
        %v319 = vunpack.c.l.b16 %v253
        %v320 = vunpack.c.l.b16 %v254
        %v321 = vunpack.c.l.b16 %v255
        %v322 = vunpack.c.l.b16 %v256
        %v323 = vunpack.c.l.b16 %v257
        %v324 = vunpack.c.l.b16 %v258
        %v325 = vunpack.c.l.b16 %v259
        %v326 = vunpack.c.l.b16 %v260
        %v327 = vunpack.c.l.b16 %v261
        %v328 = vunpack.c.l.b16 %v262
        %v329 = vunpack.c.l.b16 %v263
        %v330 = vunpack.c.l.b16 %v264
        %v331 = vunpack.c.l.b16 %v265
        %v332 = vunpack.c.l.b16 %v266
        %v333 = vunpack.c.l.b16 %v267
        %v334 = vunpack.c.l.b16 %v268
        %v335 = vunpack.c.l.b16 %v269
        %v336 = vunpack.c.l.b16 %v270
        %v337 = vpack.c.b16 %v306, %v305
        %v338 = vpack.c.b16 %v308, %v307
        %v339 = vpack.c.b16 %v310, %v309
        %v340 = vpack.c.b16 %v312, %v311
        %v341 = vpack.c.b16 %v314, %v313
        %v342 = vpack.c.b16 %v316, %v315
        %v343 = vpack.c.b16 %v318, %v317
        %v344 = vpack.c.b16 %v320, %v319
        %v345 = vpack.c.b16 %v322, %v321
        %v346 = vpack.c.b16 %v324, %v323
        %v347 = vpack.c.b16 %v326, %v325
        %v348 = vpack.c.b16 %v328, %v327
        %v349 = vpack.c.b16 %v330, %v329
        %v350 = vpack.c.b16 %v332, %v331
        %v351 = vpack.c.b16 %v334, %v333
        %v352 = vpack.c.b16 %v336, %v335
        %v355 = vunpack.c.l.b16 %v271
        %v356 = vunpack.c.l.b16 %v272
        %v357 = vpack.c.b16 %v356, %v355
        %vm358 = vcmask 97280
        %v360 = vsel %vm358, %v337, 0
        %v363 = vsel %vm358, %v338, 0
        %v366 = vsel %vm358, %v339, 0
        %v369 = vsel %vm358, %v340, 0
        %v372 = vsel %vm358, %v341, 0
        %v375 = vsel %vm358, %v342, 0
        %v378 = vsel %vm358, %v343, 0
        %v381 = vsel %vm358, %v344, 0
        %v384 = vsel %vm358, %v345, 0
        %v387 = vsel %vm358, %v346, 0
        %v390 = vsel %vm358, %v347, 0
        %v393 = vsel %vm358, %v348, 0
        %v396 = vsel %vm358, %v349, 0
        %v399 = vsel %vm358, %v350, 0
        %v402 = vsel %vm358, %v351, 0
        %v405 = vsel %vm358, %v352, 0
        %vm407 = vcmask 1045504
        %v409 = vsel %vm407, %v357, 0
        %411 = vmatprep.subr.bf16.mxu0 0
        %412 = vmatpush1.bf16.msra.mxu0 %v409
        %413 = vmatprep.subr.bf16.mxu0 0
        %414 = vmatpush1.bf16.msra.mxu0 0
        %415 = vmatprep.subr.bf16.mxu0 0
        %416 = vmatpush1.bf16.msra.mxu0 0
        %417 = vmatprep.subr.bf16.mxu0 0
        %418 = vmatpush1.bf16.msra.mxu0 0
        %419 = vmatprep.subr.bf16.mxu0 0
        %420 = vmatpush1.bf16.msra.mxu0 0
        %421 = vmatprep.subr.bf16.mxu0 0
        %422 = vmatpush1.bf16.msra.mxu0 0
        %423 = vmatprep.subr.bf16.mxu0 0
        %424 = vmatpush1.bf16.msra.mxu0 0
        %425 = vmatprep.subr.bf16.mxu0 0
        %426 = vmatpush1.bf16.msra.mxu0 0
        %427 = vmatprep.subr.bf16.mxu0 0
        %428 = vmatpush1.bf16.msra.mxu0 0
        %429 = vmatprep.subr.bf16.mxu0 0
        %430 = vmatpush1.bf16.msra.mxu0 0
        %431 = vmatprep.subr.bf16.mxu0 0
        %432 = vmatpush1.bf16.msra.mxu0 0
        %433 = vmatprep.subr.bf16.mxu0 0
        %434 = vmatpush1.bf16.msra.mxu0 0
        %435 = vmatprep.subr.bf16.mxu0 0
        %436 = vmatpush1.bf16.msra.mxu0 0
        %437 = vmatprep.subr.bf16.mxu0 0
        %438 = vmatpush1.bf16.msra.mxu0 0
        %439 = vmatprep.subr.bf16.mxu0 0
        %440 = vmatpush1.bf16.msra.mxu0 0
        %441 = vmatprep.subr.bf16.mxu0 0
        %442 = vmatpush1.bf16.msra.mxu0 0
        %443 = vmatprep.mubr.bf16.mxu0 0
        %444 = vmatmul.mubr.bf16.gmra.mrb[0].mxu0 %v360
        %v445 = vpop.f32.mrb[0].mxu0
        %v446 = vadd.f32 0.0, %v445
        %v447 = vpop.f32.mrb[0].mxu0
        %v448 = vpop.f32.mrb[0].mxu0
        %v449 = vadd.f32 0.0, %v448
        %v450 = vpop.f32.mrb[0].mxu0
        %451 = vmatprep.mubr.bf16.mxu0 0
        %452 = vmatmul.mubr.bf16.gmra.mrb[0].mxu0 %v363
        %v453 = vpop.f32.mrb[0].mxu0
        %v454 = vadd.f32 0.0, %v453
        %v455 = vpop.f32.mrb[0].mxu0
        %v456 = vpop.f32.mrb[0].mxu0
        %v457 = vadd.f32 0.0, %v456
        %v458 = vpop.f32.mrb[0].mxu0
        %459 = vmatprep.mubr.bf16.mxu0 0
        %460 = vmatmul.mubr.bf16.gmra.mrb[0].mxu0 %v366
        %v461 = vpop.f32.mrb[0].mxu0
        %v462 = vadd.f32 0.0, %v461
        %v463 = vpop.f32.mrb[0].mxu0
        %v464 = vpop.f32.mrb[0].mxu0
        %v465 = vadd.f32 0.0, %v464
        %v466 = vpop.f32.mrb[0].mxu0
        %467 = vmatprep.mubr.bf16.mxu0 0
        %468 = vmatmul.mubr.bf16.gmra.mrb[0].mxu0 %v369
        %v469 = vpop.f32.mrb[0].mxu0
        %v470 = vadd.f32 0.0, %v469
        %v471 = vpop.f32.mrb[0].mxu0
        %v472 = vpop.f32.mrb[0].mxu0
        %v473 = vadd.f32 0.0, %v472
        %v474 = vpop.f32.mrb[0].mxu0
        %475 = vmatprep.mubr.bf16.mxu0 0
        %476 = vmatmul.mubr.bf16.gmra.mrb[0].mxu0 %v372
        %v477 = vpop.f32.mrb[0].mxu0
        %v478 = vadd.f32 0.0, %v477
        %v479 = vpop.f32.mrb[0].mxu0
        %v480 = vpop.f32.mrb[0].mxu0
        %v481 = vadd.f32 0.0, %v480
        %v482 = vpop.f32.mrb[0].mxu0
        %483 = vmatprep.mubr.bf16.mxu0 0
        %484 = vmatmul.mubr.bf16.gmra.mrb[0].mxu0 %v375
        %v485 = vpop.f32.mrb[0].mxu0
        %v486 = vadd.f32 0.0, %v485
        %v487 = vpop.f32.mrb[0].mxu0
        %v488 = vpop.f32.mrb[0].mxu0
        %v489 = vadd.f32 0.0, %v488
        %v490 = vpop.f32.mrb[0].mxu0
        %491 = vmatprep.mubr.bf16.mxu0 0
        %492 = vmatmul.mubr.bf16.gmra.mrb[0].mxu0 %v378
        %v493 = vpop.f32.mrb[0].mxu0
        %v494 = vadd.f32 0.0, %v493
        %v495 = vpop.f32.mrb[0].mxu0
        %v496 = vpop.f32.mrb[0].mxu0
        %v497 = vadd.f32 0.0, %v496
        %v498 = vpop.f32.mrb[0].mxu0
        %499 = vmatprep.mubr.bf16.mxu0 0
        %500 = vmatmul.mubr.bf16.gmra.mrb[0].mxu0 %v381
        %v501 = vpop.f32.mrb[0].mxu0
        %v502 = vadd.f32 0.0, %v501
        %v503 = vpop.f32.mrb[0].mxu0
        %v504 = vpop.f32.mrb[0].mxu0
        %v505 = vadd.f32 0.0, %v504
        %v506 = vpop.f32.mrb[0].mxu0
        %507 = vmatprep.mubr.bf16.mxu0 0
        %508 = vmatmul.mubr.bf16.gmra.mrb[0].mxu0 %v384
        %v509 = vpop.f32.mrb[0].mxu0
        %v510 = vadd.f32 0.0, %v509
        %v511 = vpop.f32.mrb[0].mxu0
        %v512 = vpop.f32.mrb[0].mxu0
        %v513 = vadd.f32 0.0, %v512
        %v514 = vpop.f32.mrb[0].mxu0
        %515 = vmatprep.mubr.bf16.mxu0 0
        %516 = vmatmul.mubr.bf16.gmra.mrb[0].mxu0 %v387
        %v517 = vpop.f32.mrb[0].mxu0
        %v518 = vadd.f32 0.0, %v517
        %v519 = vpop.f32.mrb[0].mxu0
        %v520 = vpop.f32.mrb[0].mxu0
        %v521 = vadd.f32 0.0, %v520
        %v522 = vpop.f32.mrb[0].mxu0
        %523 = vmatprep.mubr.bf16.mxu0 0
        %524 = vmatmul.mubr.bf16.gmra.mrb[0].mxu0 %v390
        %v525 = vpop.f32.mrb[0].mxu0
        %v526 = vadd.f32 0.0, %v525
        %v527 = vpop.f32.mrb[0].mxu0
        %v528 = vpop.f32.mrb[0].mxu0
        %v529 = vadd.f32 0.0, %v528
        %v530 = vpop.f32.mrb[0].mxu0
        %531 = vmatprep.mubr.bf16.mxu0 0
        %532 = vmatmul.mubr.bf16.gmra.mrb[0].mxu0 %v393
        %v533 = vpop.f32.mrb[0].mxu0
        %v534 = vadd.f32 0.0, %v533
        %v535 = vpop.f32.mrb[0].mxu0
        %v536 = vpop.f32.mrb[0].mxu0
        %v537 = vadd.f32 0.0, %v536
        %v538 = vpop.f32.mrb[0].mxu0
        %539 = vmatprep.mubr.bf16.mxu0 0
        %540 = vmatmul.mubr.bf16.gmra.mrb[0].mxu0 %v396
        %v541 = vpop.f32.mrb[0].mxu0
        %v542 = vadd.f32 0.0, %v541
        %v543 = vpop.f32.mrb[0].mxu0
        %v544 = vpop.f32.mrb[0].mxu0
        %v545 = vadd.f32 0.0, %v544
        %v546 = vpop.f32.mrb[0].mxu0
        %547 = vmatprep.mubr.bf16.mxu0 0
        %548 = vmatmul.mubr.bf16.gmra.mrb[0].mxu0 %v399
        %v549 = vpop.f32.mrb[0].mxu0
        %v550 = vadd.f32 0.0, %v549
        %v551 = vpop.f32.mrb[0].mxu0
        %v552 = vpop.f32.mrb[0].mxu0
        %v553 = vadd.f32 0.0, %v552
        %v554 = vpop.f32.mrb[0].mxu0
        %555 = vmatprep.mubr.bf16.mxu0 0
        %556 = vmatmul.mubr.bf16.gmra.mrb[0].mxu0 %v402
        %v557 = vpop.f32.mrb[0].mxu0
        %v558 = vadd.f32 0.0, %v557
        %v559 = vpop.f32.mrb[0].mxu0
        %v560 = vpop.f32.mrb[0].mxu0
        %v561 = vadd.f32 0.0, %v560
        %v562 = vpop.f32.mrb[0].mxu0
        %563 = vmatprep.mubr.bf16.mxu0 0
        %564 = vmatmul.mubr.bf16.gmra.mrb[0].mxu0 %v405
        %v565 = vpop.f32.mrb[0].mxu0
        %v566 = vadd.f32 0.0, %v565
        %v567 = vpop.f32.mrb[0].mxu0
        %v568 = vpop.f32.mrb[0].mxu0
        %v569 = vadd.f32 0.0, %v568
        %v570 = vpop.f32.mrb[0].mxu0
        %571 = vdwg.mxu0
        %572 = vst [vmem:[#allocation2] sm:$0xff] %v446
        %573 = vst [vmem:[#allocation2 + $0x8] sm:$0xff] %v449
        %574 = vst [vmem:[#allocation2 + $0x10] sm:$0xff] %v454
        %575 = vst [vmem:[#allocation2 + $0x18] sm:$0xff] %v457
        %576 = vst [vmem:[#allocation2 + $0x20] sm:$0xff] %v462
        %577 = vst [vmem:[#allocation2 + $0x28] sm:$0xff] %v465
        %578 = vst [vmem:[#allocation2 + $0x30] sm:$0xff] %v470
        %579 = vst [vmem:[#allocation2 + $0x38] sm:$0xff] %v473
        %580 = vst [vmem:[#allocation2 + $0x40] sm:$0xff] %v478
        %581 = vst [vmem:[#allocation2 + $0x48] sm:$0xff] %v481
        %582 = vst [vmem:[#allocation2 + $0x50] sm:$0xff] %v486
        %583 = vst [vmem:[#allocation2 + $0x58] sm:$0xff] %v489
        %584 = vst [vmem:[#allocation2 + $0x60] sm:$0xff] %v494
        %585 = vst [vmem:[#allocation2 + $0x68] sm:$0xff] %v497
        %586 = vst [vmem:[#allocation2 + $0x70] sm:$0xff] %v502
        %587 = vst [vmem:[#allocation2 + $0x78] sm:$0xff] %v505
        %588 = vst [vmem:[#allocation2 + $0x80] sm:$0xff] %v510
        %589 = vst [vmem:[#allocation2 + $0x88] sm:$0xff] %v513
        %590 = vst [vmem:[#allocation2 + $0x90] sm:$0xff] %v518
        %591 = vst [vmem:[#allocation2 + $0x98] sm:$0xff] %v521
        %592 = vst [vmem:[#allocation2 + $0xa0] sm:$0xff] %v526
        %593 = vst [vmem:[#allocation2 + $0xa8] sm:$0xff] %v529
        %594 = vst [vmem:[#allocation2 + $0xb0] sm:$0xff] %v534
        %595 = vst [vmem:[#allocation2 + $0xb8] sm:$0xff] %v537
        %596 = vst [vmem:[#allocation2 + $0xc0] sm:$0xff] %v542
        %597 = vst [vmem:[#allocation2 + $0xc8] sm:$0xff] %v545
        %598 = vst [vmem:[#allocation2 + $0xd0] sm:$0xff] %v550
        %599 = vst [vmem:[#allocation2 + $0xd8] sm:$0xff] %v553
        %600 = vst [vmem:[#allocation2 + $0xe0] sm:$0xff] %v558
        %601 = vst [vmem:[#allocation2 + $0xe8] sm:$0xff] %v561
        %602 = vst [vmem:[#allocation2 + $0xf0] sm:$0xff] %v566
        %603 = vst [vmem:[#allocation2 + $0xf8] sm:$0xff] %v569
        %s604 = scalar_lea.vmem %s229, 8
        %v605 = vld [vmem:[%s604] sm:$0xf]
        %v606 = vld [vmem:[%s604 + $0x4] sm:$0xf]
        %v607 = vld [vmem:[%s604 + $0x8] sm:$0xf]
        %v608 = vld [vmem:[%s604 + $0xc] sm:$0xf]
        %v609 = vld [vmem:[%s604 + $0x10] sm:$0xf]
        %v610 = vld [vmem:[%s604 + $0x14] sm:$0xf]
        %v611 = vld [vmem:[%s604 + $0x18] sm:$0xf]
        %v612 = vld [vmem:[%s604 + $0x1c] sm:$0xf]
        %v613 = vld [vmem:[%s604 + $0x20] sm:$0xf]
        %v614 = vld [vmem:[%s604 + $0x24] sm:$0xf]
        %v615 = vld [vmem:[%s604 + $0x28] sm:$0xf]
        %v616 = vld [vmem:[%s604 + $0x2c] sm:$0xf]
        %v617 = vld [vmem:[%s604 + $0x30] sm:$0xf]
        %v618 = vld [vmem:[%s604 + $0x34] sm:$0xf]
        %v619 = vld [vmem:[%s604 + $0x38] sm:$0xf]
        %v620 = vld [vmem:[%s604 + $0x3c] sm:$0xf]
        %v621 = vld [vmem:[%s604 + $0x40] sm:$0xf]
        %v622 = vld [vmem:[%s604 + $0x44] sm:$0xf]
        %v623 = vld [vmem:[%s604 + $0x48] sm:$0xf]
        %v624 = vld [vmem:[%s604 + $0x4c] sm:$0xf]
        %v625 = vld [vmem:[%s604 + $0x50] sm:$0xf]
        %v626 = vld [vmem:[%s604 + $0x54] sm:$0xf]
        %v627 = vld [vmem:[%s604 + $0x58] sm:$0xf]
        %v628 = vld [vmem:[%s604 + $0x5c] sm:$0xf]
        %v629 = vld [vmem:[%s604 + $0x60] sm:$0xf]
        %v630 = vld [vmem:[%s604 + $0x64] sm:$0xf]
        %v631 = vld [vmem:[%s604 + $0x68] sm:$0xf]
        %v632 = vld [vmem:[%s604 + $0x6c] sm:$0xf]
        %v633 = vld [vmem:[%s604 + $0x70] sm:$0xf]
        %v634 = vld [vmem:[%s604 + $0x74] sm:$0xf]
        %v635 = vld [vmem:[%s604 + $0x78] sm:$0xf]
        %v636 = vld [vmem:[%s604 + $0x7c] sm:$0xf]
        %s637 = scalar_lea.vmem %s233, 8
        %v638 = vld [vmem:[%s637] sm:$0xf]
        %v639 = vld [vmem:[%s637 + $0x4] sm:$0x3]
        %v672 = vunpack.c.l.b16 %v605
        %v673 = vunpack.c.l.b16 %v606
        %v674 = vunpack.c.l.b16 %v607
        %v675 = vunpack.c.l.b16 %v608
        %v676 = vunpack.c.l.b16 %v609
        %v677 = vunpack.c.l.b16 %v610
        %v678 = vunpack.c.l.b16 %v611
        %v679 = vunpack.c.l.b16 %v612
        %v680 = vunpack.c.l.b16 %v613
        %v681 = vunpack.c.l.b16 %v614
        %v682 = vunpack.c.l.b16 %v615
        %v683 = vunpack.c.l.b16 %v616
        %v684 = vunpack.c.l.b16 %v617
        %v685 = vunpack.c.l.b16 %v618
        %v686 = vunpack.c.l.b16 %v619
        %v687 = vunpack.c.l.b16 %v620
        %v688 = vunpack.c.l.b16 %v621
        %v689 = vunpack.c.l.b16 %v622
        %v690 = vunpack.c.l.b16 %v623
        %v691 = vunpack.c.l.b16 %v624
        %v692 = vunpack.c.l.b16 %v625
        %v693 = vunpack.c.l.b16 %v626
        %v694 = vunpack.c.l.b16 %v627
        %v695 = vunpack.c.l.b16 %v628
        %v696 = vunpack.c.l.b16 %v629
        %v697 = vunpack.c.l.b16 %v630
        %v698 = vunpack.c.l.b16 %v631
        %v699 = vunpack.c.l.b16 %v632
        %v700 = vunpack.c.l.b16 %v633
        %v701 = vunpack.c.l.b16 %v634
        %v702 = vunpack.c.l.b16 %v635
        %v703 = vunpack.c.l.b16 %v636
        %v704 = vpack.c.b16 %v673, %v672
        %v705 = vpack.c.b16 %v675, %v674
        %v706 = vpack.c.b16 %v677, %v676
        %v707 = vpack.c.b16 %v679, %v678
        %v708 = vpack.c.b16 %v681, %v680
        %v709 = vpack.c.b16 %v683, %v682
        %v710 = vpack.c.b16 %v685, %v684
        %v711 = vpack.c.b16 %v687, %v686
        %v712 = vpack.c.b16 %v689, %v688
        %v713 = vpack.c.b16 %v691, %v690
        %v714 = vpack.c.b16 %v693, %v692
        %v715 = vpack.c.b16 %v695, %v694
        %v716 = vpack.c.b16 %v697, %v696
        %v717 = vpack.c.b16 %v699, %v698
        %v718 = vpack.c.b16 %v701, %v700
        %v719 = vpack.c.b16 %v703, %v702
        %v722 = vunpack.c.l.b16 %v638
        %v723 = vunpack.c.l.b16 %v639
        %v724 = vpack.c.b16 %v723, %v722
        %v726 = vsel %vm358, %v704, 0
        %v729 = vsel %vm358, %v705, 0
        %v732 = vsel %vm358, %v706, 0
        %v735 = vsel %vm358, %v707, 0
        %v738 = vsel %vm358, %v708, 0
        %v741 = vsel %vm358, %v709, 0
        %v744 = vsel %vm358, %v710, 0
        %v747 = vsel %vm358, %v711, 0
        %v750 = vsel %vm358, %v712, 0
        %v753 = vsel %vm358, %v713, 0
        %v756 = vsel %vm358, %v714, 0
        %v759 = vsel %vm358, %v715, 0
        %v762 = vsel %vm358, %v716, 0
        %v765 = vsel %vm358, %v717, 0
        %v768 = vsel %vm358, %v718, 0
        %v771 = vsel %vm358, %v719, 0
        %v774 = vsel %vm407, %v724, 0
        %776 = vmatprep.subr.bf16.mxu0 0
        %777 = vmatpush1.bf16.msra.mxu0 %v774
        %778 = vmatprep.subr.bf16.mxu0 0
        %779 = vmatpush1.bf16.msra.mxu0 0
        %780 = vmatprep.subr.bf16.mxu0 0
        %781 = vmatpush1.bf16.msra.mxu0 0
        %782 = vmatprep.subr.bf16.mxu0 0
        %783 = vmatpush1.bf16.msra.mxu0 0
        %784 = vmatprep.subr.bf16.mxu0 0
        %785 = vmatpush1.bf16.msra.mxu0 0
        %786 = vmatprep.subr.bf16.mxu0 0
        %787 = vmatpush1.bf16.msra.mxu0 0
        %788 = vmatprep.subr.bf16.mxu0 0
        %789 = vmatpush1.bf16.msra.mxu0 0
        %790 = vmatprep.subr.bf16.mxu0 0
        %791 = vmatpush1.bf16.msra.mxu0 0
        %792 = vmatprep.subr.bf16.mxu0 0
        %793 = vmatpush1.bf16.msra.mxu0 0
        %794 = vmatprep.subr.bf16.mxu0 0
        %795 = vmatpush1.bf16.msra.mxu0 0
        %796 = vmatprep.subr.bf16.mxu0 0
        %797 = vmatpush1.bf16.msra.mxu0 0
        %798 = vmatprep.subr.bf16.mxu0 0
        %799 = vmatpush1.bf16.msra.mxu0 0
        %800 = vmatprep.subr.bf16.mxu0 0
        %801 = vmatpush1.bf16.msra.mxu0 0
        %802 = vmatprep.subr.bf16.mxu0 0
        %803 = vmatpush1.bf16.msra.mxu0 0
        %804 = vmatprep.subr.bf16.mxu0 0
        %805 = vmatpush1.bf16.msra.mxu0 0
        %806 = vmatprep.subr.bf16.mxu0 0
        %807 = vmatpush1.bf16.msra.mxu0 0
        %808 = vmatprep.mubr.bf16.mxu0 0
        %809 = vmatmul.mubr.bf16.gmra.mrb[0].mxu0 %v726
        %v810 = vpop.f32.mrb[0].mxu0
        %v811 = vadd.f32 0.0, %v810
        %v812 = vpop.f32.mrb[0].mxu0
        %v813 = vpop.f32.mrb[0].mxu0
        %v814 = vadd.f32 0.0, %v813
        %v815 = vpop.f32.mrb[0].mxu0
        %816 = vmatprep.mubr.bf16.mxu0 0
        %817 = vmatmul.mubr.bf16.gmra.mrb[0].mxu0 %v729
        %v818 = vpop.f32.mrb[0].mxu0
        %v819 = vadd.f32 0.0, %v818
        %v820 = vpop.f32.mrb[0].mxu0
        %v821 = vpop.f32.mrb[0].mxu0
        %v822 = vadd.f32 0.0, %v821
        %v823 = vpop.f32.mrb[0].mxu0
        %824 = vmatprep.mubr.bf16.mxu0 0
        %825 = vmatmul.mubr.bf16.gmra.mrb[0].mxu0 %v732
        %v826 = vpop.f32.mrb[0].mxu0
        %v827 = vadd.f32 0.0, %v826
        %v828 = vpop.f32.mrb[0].mxu0
        %v829 = vpop.f32.mrb[0].mxu0
        %v830 = vadd.f32 0.0, %v829
        %v831 = vpop.f32.mrb[0].mxu0
        %832 = vmatprep.mubr.bf16.mxu0 0
        %833 = vmatmul.mubr.bf16.gmra.mrb[0].mxu0 %v735
        %v834 = vpop.f32.mrb[0].mxu0
        %v835 = vadd.f32 0.0, %v834
        %v836 = vpop.f32.mrb[0].mxu0
        %v837 = vpop.f32.mrb[0].mxu0
        %v838 = vadd.f32 0.0, %v837
        %v839 = vpop.f32.mrb[0].mxu0
        %840 = vmatprep.mubr.bf16.mxu0 0
        %841 = vmatmul.mubr.bf16.gmra.mrb[0].mxu0 %v738
        %v842 = vpop.f32.mrb[0].mxu0
        %v843 = vadd.f32 0.0, %v842
        %v844 = vpop.f32.mrb[0].mxu0
        %v845 = vpop.f32.mrb[0].mxu0
        %v846 = vadd.f32 0.0, %v845
        %v847 = vpop.f32.mrb[0].mxu0
        %848 = vmatprep.mubr.bf16.mxu0 0
        %849 = vmatmul.mubr.bf16.gmra.mrb[0].mxu0 %v741
        %v850 = vpop.f32.mrb[0].mxu0
        %v851 = vadd.f32 0.0, %v850
        %v852 = vpop.f32.mrb[0].mxu0
        %v853 = vpop.f32.mrb[0].mxu0
        %v854 = vadd.f32 0.0, %v853
        %v855 = vpop.f32.mrb[0].mxu0
        %856 = vmatprep.mubr.bf16.mxu0 0
        %857 = vmatmul.mubr.bf16.gmra.mrb[0].mxu0 %v744
        %v858 = vpop.f32.mrb[0].mxu0
        %v859 = vadd.f32 0.0, %v858
        %v860 = vpop.f32.mrb[0].mxu0
        %v861 = vpop.f32.mrb[0].mxu0
        %v862 = vadd.f32 0.0, %v861
        %v863 = vpop.f32.mrb[0].mxu0
        %864 = vmatprep.mubr.bf16.mxu0 0
        %865 = vmatmul.mubr.bf16.gmra.mrb[0].mxu0 %v747
        %v866 = vpop.f32.mrb[0].mxu0
        %v867 = vadd.f32 0.0, %v866
        %v868 = vpop.f32.mrb[0].mxu0
        %v869 = vpop.f32.mrb[0].mxu0
        %v870 = vadd.f32 0.0, %v869
        %v871 = vpop.f32.mrb[0].mxu0
        %872 = vmatprep.mubr.bf16.mxu0 0
        %873 = vmatmul.mubr.bf16.gmra.mrb[0].mxu0 %v750
        %v874 = vpop.f32.mrb[0].mxu0
        %v875 = vadd.f32 0.0, %v874
        %v876 = vpop.f32.mrb[0].mxu0
        %v877 = vpop.f32.mrb[0].mxu0
        %v878 = vadd.f32 0.0, %v877
        %v879 = vpop.f32.mrb[0].mxu0
        %880 = vmatprep.mubr.bf16.mxu0 0
        %881 = vmatmul.mubr.bf16.gmra.mrb[0].mxu0 %v753
        %v882 = vpop.f32.mrb[0].mxu0
        %v883 = vadd.f32 0.0, %v882
        %v884 = vpop.f32.mrb[0].mxu0
        %v885 = vpop.f32.mrb[0].mxu0
        %v886 = vadd.f32 0.0, %v885
        %v887 = vpop.f32.mrb[0].mxu0
        %888 = vmatprep.mubr.bf16.mxu0 0
        %889 = vmatmul.mubr.bf16.gmra.mrb[0].mxu0 %v756
        %v890 = vpop.f32.mrb[0].mxu0
        %v891 = vadd.f32 0.0, %v890
        %v892 = vpop.f32.mrb[0].mxu0
        %v893 = vpop.f32.mrb[0].mxu0
        %v894 = vadd.f32 0.0, %v893
        %v895 = vpop.f32.mrb[0].mxu0
        %896 = vmatprep.mubr.bf16.mxu0 0
        %897 = vmatmul.mubr.bf16.gmra.mrb[0].mxu0 %v759
        %v898 = vpop.f32.mrb[0].mxu0
        %v899 = vadd.f32 0.0, %v898
        %v900 = vpop.f32.mrb[0].mxu0
        %v901 = vpop.f32.mrb[0].mxu0
        %v902 = vadd.f32 0.0, %v901
        %v903 = vpop.f32.mrb[0].mxu0
        %904 = vmatprep.mubr.bf16.mxu0 0
        %905 = vmatmul.mubr.bf16.gmra.mrb[0].mxu0 %v762
        %v906 = vpop.f32.mrb[0].mxu0
        %v907 = vadd.f32 0.0, %v906
        %v908 = vpop.f32.mrb[0].mxu0
        %v909 = vpop.f32.mrb[0].mxu0
        %v910 = vadd.f32 0.0, %v909
        %v911 = vpop.f32.mrb[0].mxu0
        %912 = vmatprep.mubr.bf16.mxu0 0
        %913 = vmatmul.mubr.bf16.gmra.mrb[0].mxu0 %v765
        %v914 = vpop.f32.mrb[0].mxu0
        %v915 = vadd.f32 0.0, %v914
        %v916 = vpop.f32.mrb[0].mxu0
        %v917 = vpop.f32.mrb[0].mxu0
        %v918 = vadd.f32 0.0, %v917
        %v919 = vpop.f32.mrb[0].mxu0
        %920 = vmatprep.mubr.bf16.mxu0 0
        %921 = vmatmul.mubr.bf16.gmra.mrb[0].mxu0 %v768
        %v922 = vpop.f32.mrb[0].mxu0
        %v923 = vadd.f32 0.0, %v922
        %v924 = vpop.f32.mrb[0].mxu0
        %v925 = vpop.f32.mrb[0].mxu0
        %v926 = vadd.f32 0.0, %v925
        %v927 = vpop.f32.mrb[0].mxu0
        %928 = vmatprep.mubr.bf16.mxu0 0
        %929 = vmatmul.mubr.bf16.gmra.mrb[0].mxu0 %v771
        %v930 = vpop.f32.mrb[0].mxu0
        %v931 = vadd.f32 0.0, %v930
        %v932 = vpop.f32.mrb[0].mxu0
        %v933 = vpop.f32.mrb[0].mxu0
        %v934 = vadd.f32 0.0, %v933
        %v935 = vpop.f32.mrb[0].mxu0
        %936 = vdwg.mxu0
        %v937 = vld [vmem:[#allocation2] sm:$0xff]
        %v938 = vld [vmem:[#allocation2 + $0x8] sm:$0xff]
        %v939 = vld [vmem:[#allocation2 + $0x10] sm:$0xff]
        %v940 = vld [vmem:[#allocation2 + $0x18] sm:$0xff]
        %v941 = vld [vmem:[#allocation2 + $0x20] sm:$0xff]
        %v942 = vld [vmem:[#allocation2 + $0x28] sm:$0xff]
        %v943 = vld [vmem:[#allocation2 + $0x30] sm:$0xff]
        %v944 = vld [vmem:[#allocation2 + $0x38] sm:$0xff]
        %v945 = vld [vmem:[#allocation2 + $0x40] sm:$0xff]
        %v946 = vld [vmem:[#allocation2 + $0x48] sm:$0xff]
        %v947 = vld [vmem:[#allocation2 + $0x50] sm:$0xff]
        %v948 = vld [vmem:[#allocation2 + $0x58] sm:$0xff]
        %v949 = vld [vmem:[#allocation2 + $0x60] sm:$0xff]
        %v950 = vld [vmem:[#allocation2 + $0x68] sm:$0xff]
        %v951 = vld [vmem:[#allocation2 + $0x70] sm:$0xff]
        %v952 = vld [vmem:[#allocation2 + $0x78] sm:$0xff]
        %v953 = vld [vmem:[#allocation2 + $0x80] sm:$0xff]
        %v954 = vld [vmem:[#allocation2 + $0x88] sm:$0xff]
        %v955 = vld [vmem:[#allocation2 + $0x90] sm:$0xff]
        %v956 = vld [vmem:[#allocation2 + $0x98] sm:$0xff]
        %v957 = vld [vmem:[#allocation2 + $0xa0] sm:$0xff]
        %v958 = vld [vmem:[#allocation2 + $0xa8] sm:$0xff]
        %v959 = vld [vmem:[#allocation2 + $0xb0] sm:$0xff]
        %v960 = vld [vmem:[#allocation2 + $0xb8] sm:$0xff]
        %v961 = vld [vmem:[#allocation2 + $0xc0] sm:$0xff]
        %v962 = vld [vmem:[#allocation2 + $0xc8] sm:$0xff]
        %v963 = vld [vmem:[#allocation2 + $0xd0] sm:$0xff]
        %v964 = vld [vmem:[#allocation2 + $0xd8] sm:$0xff]
        %v965 = vld [vmem:[#allocation2 + $0xe0] sm:$0xff]
        %v966 = vld [vmem:[#allocation2 + $0xe8] sm:$0xff]
        %v967 = vld [vmem:[#allocation2 + $0xf0] sm:$0xff]
        %v968 = vld [vmem:[#allocation2 + $0xf8] sm:$0xff]
        %v969 = vadd.f32 %v937, %v811
        %v970 = vadd.f32 %v938, %v814
        %v971 = vadd.f32 %v939, %v819
        %v972 = vadd.f32 %v940, %v822
        %v973 = vadd.f32 %v941, %v827
        %v974 = vadd.f32 %v942, %v830
        %v975 = vadd.f32 %v943, %v835
        %v976 = vadd.f32 %v944, %v838
        %v977 = vadd.f32 %v945, %v843
        %v978 = vadd.f32 %v946, %v846
        %v979 = vadd.f32 %v947, %v851
        %v980 = vadd.f32 %v948, %v854
        %v981 = vadd.f32 %v949, %v859
        %v982 = vadd.f32 %v950, %v862
        %v983 = vadd.f32 %v951, %v867
        %v984 = vadd.f32 %v952, %v870
        %v985 = vadd.f32 %v953, %v875
        %v986 = vadd.f32 %v954, %v878
        %v987 = vadd.f32 %v955, %v883
        %v988 = vadd.f32 %v956, %v886
        %v989 = vadd.f32 %v957, %v891
        %v990 = vadd.f32 %v958, %v894
        %v991 = vadd.f32 %v959, %v899
        %v992 = vadd.f32 %v960, %v902
        %v993 = vadd.f32 %v961, %v907
        %v994 = vadd.f32 %v962, %v910
        %v995 = vadd.f32 %v963, %v915
        %v996 = vadd.f32 %v964, %v918
        %v997 = vadd.f32 %v965, %v923
        %v998 = vadd.f32 %v966, %v926
        %v999 = vadd.f32 %v967, %v931
        %v1000 = vadd.f32 %v968, %v934
        %1001 = vst [vmem:[#allocation2] sm:$0xff] %v969
        %1002 = vst [vmem:[#allocation2 + $0x8] sm:$0xff] %v970
        %1003 = vst [vmem:[#allocation2 + $0x10] sm:$0xff] %v971
        %1004 = vst [vmem:[#allocation2 + $0x18] sm:$0xff] %v972
        %1005 = vst [vmem:[#allocation2 + $0x20] sm:$0xff] %v973
        %1006 = vst [vmem:[#allocation2 + $0x28] sm:$0xff] %v974
        %1007 = vst [vmem:[#allocation2 + $0x30] sm:$0xff] %v975
        %1008 = vst [vmem:[#allocation2 + $0x38] sm:$0xff] %v976
        %1009 = vst [vmem:[#allocation2 + $0x40] sm:$0xff] %v977
        %1010 = vst [vmem:[#allocation2 + $0x48] sm:$0xff] %v978
        %1011 = vst [vmem:[#allocation2 + $0x50] sm:$0xff] %v979
        %1012 = vst [vmem:[#allocation2 + $0x58] sm:$0xff] %v980
        %1013 = vst [vmem:[#allocation2 + $0x60] sm:$0xff] %v981
        %1014 = vst [vmem:[#allocation2 + $0x68] sm:$0xff] %v982
        %1015 = vst [vmem:[#allocation2 + $0x70] sm:$0xff] %v983
        %1016 = vst [vmem:[#allocation2 + $0x78] sm:$0xff] %v984
        %1017 = vst [vmem:[#allocation2 + $0x80] sm:$0xff] %v985
        %1018 = vst [vmem:[#allocation2 + $0x88] sm:$0xff] %v986
        %1019 = vst [vmem:[#allocation2 + $0x90] sm:$0xff] %v987
        %1020 = vst [vmem:[#allocation2 + $0x98] sm:$0xff] %v988
        %1021 = vst [vmem:[#allocation2 + $0xa0] sm:$0xff] %v989
        %1022 = vst [vmem:[#allocation2 + $0xa8] sm:$0xff] %v990
        %1023 = vst [vmem:[#allocation2 + $0xb0] sm:$0xff] %v991
        %1024 = vst [vmem:[#allocation2 + $0xb8] sm:$0xff] %v992
        %1025 = vst [vmem:[#allocation2 + $0xc0] sm:$0xff] %v993
        %1026 = vst [vmem:[#allocation2 + $0xc8] sm:$0xff] %v994
        %1027 = vst [vmem:[#allocation2 + $0xd0] sm:$0xff] %v995
        %1028 = vst [vmem:[#allocation2 + $0xd8] sm:$0xff] %v996
        %1029 = vst [vmem:[#allocation2 + $0xe0] sm:$0xff] %v997
        %1030 = vst [vmem:[#allocation2 + $0xe8] sm:$0xff] %v998
        %1031 = vst [vmem:[#allocation2 + $0xf0] sm:$0xff] %v999
        %1032 = vst [vmem:[#allocation2 + $0xf8] sm:$0xff] %v1000
        %s1033 = scalar_lea.vmem %s229, 16
        %v1034 = vld [vmem:[%s1033] sm:$0xf]
        %v1035 = vld [vmem:[%s1033 + $0x4] sm:$0xf]
        %v1036 = vld [vmem:[%s1033 + $0x8] sm:$0xf]
        %v1037 = vld [vmem:[%s1033 + $0xc] sm:$0xf]
        %v1038 = vld [vmem:[%s1033 + $0x10] sm:$0xf]
        %v1039 = vld [vmem:[%s1033 + $0x14] sm:$0xf]
        %v1040 = vld [vmem:[%s1033 + $0x18] sm:$0xf]
        %v1041 = vld [vmem:[%s1033 + $0x1c] sm:$0xf]
        %v1042 = vld [vmem:[%s1033 + $0x20] sm:$0xf]
        %v1043 = vld [vmem:[%s1033 + $0x24] sm:$0xf]
        %v1044 = vld [vmem:[%s1033 + $0x28] sm:$0xf]
        %v1045 = vld [vmem:[%s1033 + $0x2c] sm:$0xf]
        %v1046 = vld [vmem:[%s1033 + $0x30] sm:$0xf]
        %v1047 = vld [vmem:[%s1033 + $0x34] sm:$0xf]
        %v1048 = vld [vmem:[%s1033 + $0x38] sm:$0xf]
        %v1049 = vld [vmem:[%s1033 + $0x3c] sm:$0xf]
        %v1050 = vld [vmem:[%s1033 + $0x40] sm:$0xf]
        %v1051 = vld [vmem:[%s1033 + $0x44] sm:$0xf]
        %v1052 = vld [vmem:[%s1033 + $0x48] sm:$0xf]
        %v1053 = vld [vmem:[%s1033 + $0x4c] sm:$0xf]
        %v1054 = vld [vmem:[%s1033 + $0x50] sm:$0xf]
        %v1055 = vld [vmem:[%s1033 + $0x54] sm:$0xf]
        %v1056 = vld [vmem:[%s1033 + $0x58] sm:$0xf]
        %v1057 = vld [vmem:[%s1033 + $0x5c] sm:$0xf]
        %v1058 = vld [vmem:[%s1033 + $0x60] sm:$0xf]
        %v1059 = vld [vmem:[%s1033 + $0x64] sm:$0xf]
        %v1060 = vld [vmem:[%s1033 + $0x68] sm:$0xf]
        %v1061 = vld [vmem:[%s1033 + $0x6c] sm:$0xf]
        %v1062 = vld [vmem:[%s1033 + $0x70] sm:$0xf]
        %v1063 = vld [vmem:[%s1033 + $0x74] sm:$0xf]
        %v1064 = vld [vmem:[%s1033 + $0x78] sm:$0xf]
        %v1065 = vld [vmem:[%s1033 + $0x7c] sm:$0xf]
        %s1066 = scalar_lea.vmem %s233, 16
        %v1067 = vld [vmem:[%s1066] sm:$0xf]
        %v1068 = vld [vmem:[%s1066 + $0x4] sm:$0x3]
        %v1101 = vunpack.c.l.b16 %v1034
        %v1102 = vunpack.c.l.b16 %v1035
        %v1103 = vunpack.c.l.b16 %v1036
        %v1104 = vunpack.c.l.b16 %v1037
        %v1105 = vunpack.c.l.b16 %v1038
        %v1106 = vunpack.c.l.b16 %v1039
        %v1107 = vunpack.c.l.b16 %v1040
        %v1108 = vunpack.c.l.b16 %v1041
        %v1109 = vunpack.c.l.b16 %v1042
        %v1110 = vunpack.c.l.b16 %v1043
        %v1111 = vunpack.c.l.b16 %v1044
        %v1112 = vunpack.c.l.b16 %v1045
        %v1113 = vunpack.c.l.b16 %v1046
        %v1114 = vunpack.c.l.b16 %v1047
        %v1115 = vunpack.c.l.b16 %v1048
        %v1116 = vunpack.c.l.b16 %v1049
        %v1117 = vunpack.c.l.b16 %v1050
        %v1118 = vunpack.c.l.b16 %v1051
        %v1119 = vunpack.c.l.b16 %v1052
        %v1120 = vunpack.c.l.b16 %v1053
        %v1121 = vunpack.c.l.b16 %v1054
        %v1122 = vunpack.c.l.b16 %v1055
        %v1123 = vunpack.c.l.b16 %v1056
        %v1124 = vunpack.c.l.b16 %v1057
        %v1125 = vunpack.c.l.b16 %v1058
        %v1126 = vunpack.c.l.b16 %v1059
        %v1127 = vunpack.c.l.b16 %v1060
        %v1128 = vunpack.c.l.b16 %v1061
        %v1129 = vunpack.c.l.b16 %v1062
        %v1130 = vunpack.c.l.b16 %v1063
        %v1131 = vunpack.c.l.b16 %v1064
        %v1132 = vunpack.c.l.b16 %v1065
        %v1133 = vpack.c.b16 %v1102, %v1101
        %v1134 = vpack.c.b16 %v1104, %v1103
        %v1135 = vpack.c.b16 %v1106, %v1105
        %v1136 = vpack.c.b16 %v1108, %v1107
        %v1137 = vpack.c.b16 %v1110, %v1109
        %v1138 = vpack.c.b16 %v1112, %v1111
        %v1139 = vpack.c.b16 %v1114, %v1113
        %v1140 = vpack.c.b16 %v1116, %v1115
        %v1141 = vpack.c.b16 %v1118, %v1117
        %v1142 = vpack.c.b16 %v1120, %v1119
        %v1143 = vpack.c.b16 %v1122, %v1121
        %v1144 = vpack.c.b16 %v1124, %v1123
        %v1145 = vpack.c.b16 %v1126, %v1125
        %v1146 = vpack.c.b16 %v1128, %v1127
        %v1147 = vpack.c.b16 %v1130, %v1129
        %v1148 = vpack.c.b16 %v1132, %v1131
        %v1151 = vunpack.c.l.b16 %v1067
        %v1152 = vunpack.c.l.b16 %v1068
        %v1153 = vpack.c.b16 %v1152, %v1151
        %v1155 = vsel %vm358, %v1133, 0
        %v1158 = vsel %vm358, %v1134, 0
        %v1161 = vsel %vm358, %v1135, 0
        %v1164 = vsel %vm358, %v1136, 0
        %v1167 = vsel %vm358, %v1137, 0
        %v1170 = vsel %vm358, %v1138, 0
        %v1173 = vsel %vm358, %v1139, 0
        %v1176 = vsel %vm358, %v1140, 0
        %v1179 = vsel %vm358, %v1141, 0
        %v1182 = vsel %vm358, %v1142, 0
        %v1185 = vsel %vm358, %v1143, 0
        %v1188 = vsel %vm358, %v1144, 0
        %v1191 = vsel %vm358, %v1145, 0
        %v1194 = vsel %vm358, %v1146, 0
        %v1197 = vsel %vm358, %v1147, 0
        %v1200 = vsel %vm358, %v1148, 0
        %v1203 = vsel %vm407, %v1153, 0
        %1205 = vmatprep.subr.bf16.mxu0 0
        %1206 = vmatpush1.bf16.msra.mxu0 %v1203
        %1207 = vmatprep.subr.bf16.mxu0 0
        %1208 = vmatpush1.bf16.msra.mxu0 0
        %1209 = vmatprep.subr.bf16.mxu0 0
        %1210 = vmatpush1.bf16.msra.mxu0 0
        %1211 = vmatprep.subr.bf16.mxu0 0
        %1212 = vmatpush1.bf16.msra.mxu0 0
        %1213 = vmatprep.subr.bf16.mxu0 0
        %1214 = vmatpush1.bf16.msra.mxu0 0
        %1215 = vmatprep.subr.bf16.mxu0 0
        %1216 = vmatpush1.bf16.msra.mxu0 0
        %1217 = vmatprep.subr.bf16.mxu0 0
        %1218 = vmatpush1.bf16.msra.mxu0 0
        %1219 = vmatprep.subr.bf16.mxu0 0
        %1220 = vmatpush1.bf16.msra.mxu0 0
        %1221 = vmatprep.subr.bf16.mxu0 0
        %1222 = vmatpush1.bf16.msra.mxu0 0
        %1223 = vmatprep.subr.bf16.mxu0 0
        %1224 = vmatpush1.bf16.msra.mxu0 0
        %1225 = vmatprep.subr.bf16.mxu0 0
        %1226 = vmatpush1.bf16.msra.mxu0 0
        %1227 = vmatprep.subr.bf16.mxu0 0
        %1228 = vmatpush1.bf16.msra.mxu0 0
        %1229 = vmatprep.subr.bf16.mxu0 0
        %1230 = vmatpush1.bf16.msra.mxu0 0
        %1231 = vmatprep.subr.bf16.mxu0 0
        %1232 = vmatpush1.bf16.msra.mxu0 0
        %1233 = vmatprep.subr.bf16.mxu0 0
        %1234 = vmatpush1.bf16.msra.mxu0 0
        %1235 = vmatprep.subr.bf16.mxu0 0
        %1236 = vmatpush1.bf16.msra.mxu0 0
        %1237 = vmatprep.mubr.bf16.mxu0 0
        %1238 = vmatmul.mubr.bf16.gmra.mrb[0].mxu0 %v1155
        %v1239 = vpop.f32.mrb[0].mxu0
        %v1240 = vadd.f32 0.0, %v1239
        %v1241 = vpop.f32.mrb[0].mxu0
        %v1242 = vpop.f32.mrb[0].mxu0
        %v1243 = vadd.f32 0.0, %v1242
        %v1244 = vpop.f32.mrb[0].mxu0
        %1245 = vmatprep.mubr.bf16.mxu0 0
        %1246 = vmatmul.mubr.bf16.gmra.mrb[0].mxu0 %v1158
        %v1247 = vpop.f32.mrb[0].mxu0
        %v1248 = vadd.f32 0.0, %v1247
        %v1249 = vpop.f32.mrb[0].mxu0
        %v1250 = vpop.f32.mrb[0].mxu0
        %v1251 = vadd.f32 0.0, %v1250
        %v1252 = vpop.f32.mrb[0].mxu0
        %1253 = vmatprep.mubr.bf16.mxu0 0
        %1254 = vmatmul.mubr.bf16.gmra.mrb[0].mxu0 %v1161
        %v1255 = vpop.f32.mrb[0].mxu0
        %v1256 = vadd.f32 0.0, %v1255
        %v1257 = vpop.f32.mrb[0].mxu0
        %v1258 = vpop.f32.mrb[0].mxu0
        %v1259 = vadd.f32 0.0, %v1258
        %v1260 = vpop.f32.mrb[0].mxu0
        %1261 = vmatprep.mubr.bf16.mxu0 0
        %1262 = vmatmul.mubr.bf16.gmra.mrb[0].mxu0 %v1164
        %v1263 = vpop.f32.mrb[0].mxu0
        %v1264 = vadd.f32 0.0, %v1263
        %v1265 = vpop.f32.mrb[0].mxu0
        %v1266 = vpop.f32.mrb[0].mxu0
        %v1267 = vadd.f32 0.0, %v1266
        %v1268 = vpop.f32.mrb[0].mxu0
        %1269 = vmatprep.mubr.bf16.mxu0 0
        %1270 = vmatmul.mubr.bf16.gmra.mrb[0].mxu0 %v1167
        %v1271 = vpop.f32.mrb[0].mxu0
        %v1272 = vadd.f32 0.0, %v1271
        %v1273 = vpop.f32.mrb[0].mxu0
        %v1274 = vpop.f32.mrb[0].mxu0
        %v1275 = vadd.f32 0.0, %v1274
        %v1276 = vpop.f32.mrb[0].mxu0
        %1277 = vmatprep.mubr.bf16.mxu0 0
        %1278 = vmatmul.mubr.bf16.gmra.mrb[0].mxu0 %v1170
        %v1279 = vpop.f32.mrb[0].mxu0
        %v1280 = vadd.f32 0.0, %v1279
        %v1281 = vpop.f32.mrb[0].mxu0
        %v1282 = vpop.f32.mrb[0].mxu0
        %v1283 = vadd.f32 0.0, %v1282
        %v1284 = vpop.f32.mrb[0].mxu0
        %1285 = vmatprep.mubr.bf16.mxu0 0
        %1286 = vmatmul.mubr.bf16.gmra.mrb[0].mxu0 %v1173
        %v1287 = vpop.f32.mrb[0].mxu0
        %v1288 = vadd.f32 0.0, %v1287
        %v1289 = vpop.f32.mrb[0].mxu0
        %v1290 = vpop.f32.mrb[0].mxu0
        %v1291 = vadd.f32 0.0, %v1290
        %v1292 = vpop.f32.mrb[0].mxu0
        %1293 = vmatprep.mubr.bf16.mxu0 0
        %1294 = vmatmul.mubr.bf16.gmra.mrb[0].mxu0 %v1176
        %v1295 = vpop.f32.mrb[0].mxu0
        %v1296 = vadd.f32 0.0, %v1295
        %v1297 = vpop.f32.mrb[0].mxu0
        %v1298 = vpop.f32.mrb[0].mxu0
        %v1299 = vadd.f32 0.0, %v1298
        %v1300 = vpop.f32.mrb[0].mxu0
        %1301 = vmatprep.mubr.bf16.mxu0 0
        %1302 = vmatmul.mubr.bf16.gmra.mrb[0].mxu0 %v1179
        %v1303 = vpop.f32.mrb[0].mxu0
        %v1304 = vadd.f32 0.0, %v1303
        %v1305 = vpop.f32.mrb[0].mxu0
        %v1306 = vpop.f32.mrb[0].mxu0
        %v1307 = vadd.f32 0.0, %v1306
        %v1308 = vpop.f32.mrb[0].mxu0
        %1309 = vmatprep.mubr.bf16.mxu0 0
        %1310 = vmatmul.mubr.bf16.gmra.mrb[0].mxu0 %v1182
        %v1311 = vpop.f32.mrb[0].mxu0
        %v1312 = vadd.f32 0.0, %v1311
        %v1313 = vpop.f32.mrb[0].mxu0
        %v1314 = vpop.f32.mrb[0].mxu0
        %v1315 = vadd.f32 0.0, %v1314
        %v1316 = vpop.f32.mrb[0].mxu0
        %1317 = vmatprep.mubr.bf16.mxu0 0
        %1318 = vmatmul.mubr.bf16.gmra.mrb[0].mxu0 %v1185
        %v1319 = vpop.f32.mrb[0].mxu0
        %v1320 = vadd.f32 0.0, %v1319
        %v1321 = vpop.f32.mrb[0].mxu0
        %v1322 = vpop.f32.mrb[0].mxu0
        %v1323 = vadd.f32 0.0, %v1322
        %v1324 = vpop.f32.mrb[0].mxu0
        %1325 = vmatprep.mubr.bf16.mxu0 0
        %1326 = vmatmul.mubr.bf16.gmra.mrb[0].mxu0 %v1188
        %v1327 = vpop.f32.mrb[0].mxu0
        %v1328 = vadd.f32 0.0, %v1327
        %v1329 = vpop.f32.mrb[0].mxu0
        %v1330 = vpop.f32.mrb[0].mxu0
        %v1331 = vadd.f32 0.0, %v1330
        %v1332 = vpop.f32.mrb[0].mxu0
        %1333 = vmatprep.mubr.bf16.mxu0 0
        %1334 = vmatmul.mubr.bf16.gmra.mrb[0].mxu0 %v1191
        %v1335 = vpop.f32.mrb[0].mxu0
        %v1336 = vadd.f32 0.0, %v1335
        %v1337 = vpop.f32.mrb[0].mxu0
        %v1338 = vpop.f32.mrb[0].mxu0
        %v1339 = vadd.f32 0.0, %v1338
        %v1340 = vpop.f32.mrb[0].mxu0
        %1341 = vmatprep.mubr.bf16.mxu0 0
        %1342 = vmatmul.mubr.bf16.gmra.mrb[0].mxu0 %v1194
        %v1343 = vpop.f32.mrb[0].mxu0
        %v1344 = vadd.f32 0.0, %v1343
        %v1345 = vpop.f32.mrb[0].mxu0
        %v1346 = vpop.f32.mrb[0].mxu0
        %v1347 = vadd.f32 0.0, %v1346
        %v1348 = vpop.f32.mrb[0].mxu0
        %1349 = vmatprep.mubr.bf16.mxu0 0
        %1350 = vmatmul.mubr.bf16.gmra.mrb[0].mxu0 %v1197
        %v1351 = vpop.f32.mrb[0].mxu0
        %v1352 = vadd.f32 0.0, %v1351
        %v1353 = vpop.f32.mrb[0].mxu0
        %v1354 = vpop.f32.mrb[0].mxu0
        %v1355 = vadd.f32 0.0, %v1354
        %v1356 = vpop.f32.mrb[0].mxu0
        %1357 = vmatprep.mubr.bf16.mxu0 0
        %1358 = vmatmul.mubr.bf16.gmra.mrb[0].mxu0 %v1200
        %v1359 = vpop.f32.mrb[0].mxu0
        %v1360 = vadd.f32 0.0, %v1359
        %v1361 = vpop.f32.mrb[0].mxu0
        %v1362 = vpop.f32.mrb[0].mxu0
        %v1363 = vadd.f32 0.0, %v1362
        %v1364 = vpop.f32.mrb[0].mxu0
        %1365 = vdwg.mxu0
        %v1366 = vld [vmem:[#allocation2] sm:$0xff]
        %v1367 = vld [vmem:[#allocation2 + $0x8] sm:$0xff]
        %v1368 = vld [vmem:[#allocation2 + $0x10] sm:$0xff]
        %v1369 = vld [vmem:[#allocation2 + $0x18] sm:$0xff]
        %v1370 = vld [vmem:[#allocation2 + $0x20] sm:$0xff]
        %v1371 = vld [vmem:[#allocation2 + $0x28] sm:$0xff]
        %v1372 = vld [vmem:[#allocation2 + $0x30] sm:$0xff]
        %v1373 = vld [vmem:[#allocation2 + $0x38] sm:$0xff]
        %v1374 = vld [vmem:[#allocation2 + $0x40] sm:$0xff]
        %v1375 = vld [vmem:[#allocation2 + $0x48] sm:$0xff]
        %v1376 = vld [vmem:[#allocation2 + $0x50] sm:$0xff]
        %v1377 = vld [vmem:[#allocation2 + $0x58] sm:$0xff]
        %v1378 = vld [vmem:[#allocation2 + $0x60] sm:$0xff]
        %v1379 = vld [vmem:[#allocation2 + $0x68] sm:$0xff]
        %v1380 = vld [vmem:[#allocation2 + $0x70] sm:$0xff]
        %v1381 = vld [vmem:[#allocation2 + $0x78] sm:$0xff]
        %v1382 = vld [vmem:[#allocation2 + $0x80] sm:$0xff]
        %v1383 = vld [vmem:[#allocation2 + $0x88] sm:$0xff]
        %v1384 = vld [vmem:[#allocation2 + $0x90] sm:$0xff]
        %v1385 = vld [vmem:[#allocation2 + $0x98] sm:$0xff]
        %v1386 = vld [vmem:[#allocation2 + $0xa0] sm:$0xff]
        %v1387 = vld [vmem:[#allocation2 + $0xa8] sm:$0xff]
        %v1388 = vld [vmem:[#allocation2 + $0xb0] sm:$0xff]
        %v1389 = vld [vmem:[#allocation2 + $0xb8] sm:$0xff]
        %v1390 = vld [vmem:[#allocation2 + $0xc0] sm:$0xff]
        %v1391 = vld [vmem:[#allocation2 + $0xc8] sm:$0xff]
        %v1392 = vld [vmem:[#allocation2 + $0xd0] sm:$0xff]
        %v1393 = vld [vmem:[#allocation2 + $0xd8] sm:$0xff]
        %v1394 = vld [vmem:[#allocation2 + $0xe0] sm:$0xff]
        %v1395 = vld [vmem:[#allocation2 + $0xe8] sm:$0xff]
        %v1396 = vld [vmem:[#allocation2 + $0xf0] sm:$0xff]
        %v1397 = vld [vmem:[#allocation2 + $0xf8] sm:$0xff]
        %v1398 = vadd.f32 %v1366, %v1240
        %v1399 = vadd.f32 %v1367, %v1243
        %v1400 = vadd.f32 %v1368, %v1248
        %v1401 = vadd.f32 %v1369, %v1251
        %v1402 = vadd.f32 %v1370, %v1256
        %v1403 = vadd.f32 %v1371, %v1259
        %v1404 = vadd.f32 %v1372, %v1264
        %v1405 = vadd.f32 %v1373, %v1267
        %v1406 = vadd.f32 %v1374, %v1272
        %v1407 = vadd.f32 %v1375, %v1275
        %v1408 = vadd.f32 %v1376, %v1280
        %v1409 = vadd.f32 %v1377, %v1283
        %v1410 = vadd.f32 %v1378, %v1288
        %v1411 = vadd.f32 %v1379, %v1291
        %v1412 = vadd.f32 %v1380, %v1296
        %v1413 = vadd.f32 %v1381, %v1299
        %v1414 = vadd.f32 %v1382, %v1304
        %v1415 = vadd.f32 %v1383, %v1307
        %v1416 = vadd.f32 %v1384, %v1312
        %v1417 = vadd.f32 %v1385, %v1315
        %v1418 = vadd.f32 %v1386, %v1320
        %v1419 = vadd.f32 %v1387, %v1323
        %v1420 = vadd.f32 %v1388, %v1328
        %v1421 = vadd.f32 %v1389, %v1331
        %v1422 = vadd.f32 %v1390, %v1336
        %v1423 = vadd.f32 %v1391, %v1339
        %v1424 = vadd.f32 %v1392, %v1344
        %v1425 = vadd.f32 %v1393, %v1347
        %v1426 = vadd.f32 %v1394, %v1352
        %v1427 = vadd.f32 %v1395, %v1355
        %v1428 = vadd.f32 %v1396, %v1360
        %v1429 = vadd.f32 %v1397, %v1363
        %1430 = vst [vmem:[#allocation2] sm:$0xff] %v1398
        %1431 = vst [vmem:[#allocation2 + $0x8] sm:$0xff] %v1399
        %1432 = vst [vmem:[#allocation2 + $0x10] sm:$0xff] %v1400
        %1433 = vst [vmem:[#allocation2 + $0x18] sm:$0xff] %v1401
        %1434 = vst [vmem:[#allocation2 + $0x20] sm:$0xff] %v1402
        %1435 = vst [vmem:[#allocation2 + $0x28] sm:$0xff] %v1403
        %1436 = vst [vmem:[#allocation2 + $0x30] sm:$0xff] %v1404
        %1437 = vst [vmem:[#allocation2 + $0x38] sm:$0xff] %v1405
        %1438 = vst [vmem:[#allocation2 + $0x40] sm:$0xff] %v1406
        %1439 = vst [vmem:[#allocation2 + $0x48] sm:$0xff] %v1407
        %1440 = vst [vmem:[#allocation2 + $0x50] sm:$0xff] %v1408
        %1441 = vst [vmem:[#allocation2 + $0x58] sm:$0xff] %v1409
        %1442 = vst [vmem:[#allocation2 + $0x60] sm:$0xff] %v1410
        %1443 = vst [vmem:[#allocation2 + $0x68] sm:$0xff] %v1411
        %1444 = vst [vmem:[#allocation2 + $0x70] sm:$0xff] %v1412
        %1445 = vst [vmem:[#allocation2 + $0x78] sm:$0xff] %v1413
        %1446 = vst [vmem:[#allocation2 + $0x80] sm:$0xff] %v1414
        %1447 = vst [vmem:[#allocation2 + $0x88] sm:$0xff] %v1415
        %1448 = vst [vmem:[#allocation2 + $0x90] sm:$0xff] %v1416
        %1449 = vst [vmem:[#allocation2 + $0x98] sm:$0xff] %v1417
        %1450 = vst [vmem:[#allocation2 + $0xa0] sm:$0xff] %v1418
        %1451 = vst [vmem:[#allocation2 + $0xa8] sm:$0xff] %v1419
        %1452 = vst [vmem:[#allocation2 + $0xb0] sm:$0xff] %v1420
        %1453 = vst [vmem:[#allocation2 + $0xb8] sm:$0xff] %v1421
        %1454 = vst [vmem:[#allocation2 + $0xc0] sm:$0xff] %v1422
        %1455 = vst [vmem:[#allocation2 + $0xc8] sm:$0xff] %v1423
        %1456 = vst [vmem:[#allocation2 + $0xd0] sm:$0xff] %v1424
        %1457 = vst [vmem:[#allocation2 + $0xd8] sm:$0xff] %v1425
        %1458 = vst [vmem:[#allocation2 + $0xe0] sm:$0xff] %v1426
        %1459 = vst [vmem:[#allocation2 + $0xe8] sm:$0xff] %v1427
        %1460 = vst [vmem:[#allocation2 + $0xf0] sm:$0xff] %v1428
        %1461 = vst [vmem:[#allocation2 + $0xf8] sm:$0xff] %v1429
        %v1462 = vld [vmem:[#allocation2] sm:$0xff]
        %v1463 = vld [vmem:[#allocation2 + $0x8] sm:$0xff]
        %v1464 = vld [vmem:[#allocation2 + $0x10] sm:$0xff]
        %v1465 = vld [vmem:[#allocation2 + $0x18] sm:$0xff]
        %v1466 = vld [vmem:[#allocation2 + $0x20] sm:$0xff]
        %v1467 = vld [vmem:[#allocation2 + $0x28] sm:$0xff]
        %v1468 = vld [vmem:[#allocation2 + $0x30] sm:$0xff]
        %v1469 = vld [vmem:[#allocation2 + $0x38] sm:$0xff]
        %v1470 = vld [vmem:[#allocation2 + $0x40] sm:$0xff]
        %v1471 = vld [vmem:[#allocation2 + $0x48] sm:$0xff]
        %v1472 = vld [vmem:[#allocation2 + $0x50] sm:$0xff]
        %v1473 = vld [vmem:[#allocation2 + $0x58] sm:$0xff]
        %v1474 = vld [vmem:[#allocation2 + $0x60] sm:$0xff]
        %v1475 = vld [vmem:[#allocation2 + $0x68] sm:$0xff]
        %v1476 = vld [vmem:[#allocation2 + $0x70] sm:$0xff]
        %v1477 = vld [vmem:[#allocation2 + $0x78] sm:$0xff]
        %v1478 = vld [vmem:[#allocation2 + $0x80] sm:$0xff]
        %v1479 = vld [vmem:[#allocation2 + $0x88] sm:$0xff]
        %v1480 = vld [vmem:[#allocation2 + $0x90] sm:$0xff]
        %v1481 = vld [vmem:[#allocation2 + $0x98] sm:$0xff]
        %v1482 = vld [vmem:[#allocation2 + $0xa0] sm:$0xff]
        %v1483 = vld [vmem:[#allocation2 + $0xa8] sm:$0xff]
        %v1484 = vld [vmem:[#allocation2 + $0xb0] sm:$0xff]
        %v1485 = vld [vmem:[#allocation2 + $0xb8] sm:$0xff]
        %v1486 = vld [vmem:[#allocation2 + $0xc0] sm:$0xff]
        %v1487 = vld [vmem:[#allocation2 + $0xc8] sm:$0xff]
        %v1488 = vld [vmem:[#allocation2 + $0xd0] sm:$0xff]
        %v1489 = vld [vmem:[#allocation2 + $0xd8] sm:$0xff]
        %v1490 = vld [vmem:[#allocation2 + $0xe0] sm:$0xff]
        %v1491 = vld [vmem:[#allocation2 + $0xe8] sm:$0xff]
        %v1492 = vld [vmem:[#allocation2 + $0xf0] sm:$0xff]
        %v1493 = vld [vmem:[#allocation2 + $0xf8] sm:$0xff]
        %v1494 = vld [vmem:[%s236] sm:$0x1]
        %v1496 = vlaneseq
        %v1497 = vshrl.u32 %v1496, 7
        %v1498 = vsub.s32 0, %v1497
        %v1499 = vrot.slane %v1494, %v1498
        %v1501 = vadd.f32 %v1462, %v1499
        %v1502 = vadd.f32 %v1463, %v1499
        %v1503 = vadd.f32 %v1464, %v1499
        %v1504 = vadd.f32 %v1465, %v1499
        %v1505 = vadd.f32 %v1466, %v1499
        %v1506 = vadd.f32 %v1467, %v1499
        %v1507 = vadd.f32 %v1468, %v1499
        %v1508 = vadd.f32 %v1469, %v1499
        %v1509 = vadd.f32 %v1470, %v1499
        %v1510 = vadd.f32 %v1471, %v1499
        %v1511 = vadd.f32 %v1472, %v1499
        %v1512 = vadd.f32 %v1473, %v1499
        %v1513 = vadd.f32 %v1474, %v1499
        %v1514 = vadd.f32 %v1475, %v1499
        %v1515 = vadd.f32 %v1476, %v1499
        %v1516 = vadd.f32 %v1477, %v1499
        %v1517 = vadd.f32 %v1478, %v1499
        %v1518 = vadd.f32 %v1479, %v1499
        %v1519 = vadd.f32 %v1480, %v1499
        %v1520 = vadd.f32 %v1481, %v1499
        %v1521 = vadd.f32 %v1482, %v1499
        %v1522 = vadd.f32 %v1483, %v1499
        %v1523 = vadd.f32 %v1484, %v1499
        %v1524 = vadd.f32 %v1485, %v1499
        %v1525 = vadd.f32 %v1486, %v1499
        %v1526 = vadd.f32 %v1487, %v1499
        %v1527 = vadd.f32 %v1488, %v1499
        %v1528 = vadd.f32 %v1489, %v1499
        %v1529 = vadd.f32 %v1490, %v1499
        %v1530 = vadd.f32 %v1491, %v1499
        %v1531 = vadd.f32 %v1492, %v1499
        %v1532 = vadd.f32 %v1493, %v1499
        %v1533 = vmax.f32 %v1501, 0.0
        %v1534 = vmax.f32 %v1502, 0.0
        %v1535 = vmax.f32 %v1503, 0.0
        %v1536 = vmax.f32 %v1504, 0.0
        %v1537 = vmax.f32 %v1505, 0.0
        %v1538 = vmax.f32 %v1506, 0.0
        %v1539 = vmax.f32 %v1507, 0.0
        %v1540 = vmax.f32 %v1508, 0.0
        %v1541 = vmax.f32 %v1509, 0.0
        %v1542 = vmax.f32 %v1510, 0.0
        %v1543 = vmax.f32 %v1511, 0.0
        %v1544 = vmax.f32 %v1512, 0.0
        %v1545 = vmax.f32 %v1513, 0.0
        %v1546 = vmax.f32 %v1514, 0.0
        %v1547 = vmax.f32 %v1515, 0.0
        %v1548 = vmax.f32 %v1516, 0.0
        %v1549 = vmax.f32 %v1517, 0.0
        %v1550 = vmax.f32 %v1518, 0.0
        %v1551 = vmax.f32 %v1519, 0.0
        %v1552 = vmax.f32 %v1520, 0.0
        %v1553 = vmax.f32 %v1521, 0.0
        %v1554 = vmax.f32 %v1522, 0.0
        %v1555 = vmax.f32 %v1523, 0.0
        %v1556 = vmax.f32 %v1524, 0.0
        %v1557 = vmax.f32 %v1525, 0.0
        %v1558 = vmax.f32 %v1526, 0.0
        %v1559 = vmax.f32 %v1527, 0.0
        %v1560 = vmax.f32 %v1528, 0.0
        %v1561 = vmax.f32 %v1529, 0.0
        %v1562 = vmax.f32 %v1530, 0.0
        %v1563 = vmax.f32 %v1531, 0.0
        %v1564 = vmax.f32 %v1532, 0.0
        %v1565 = vpack.c.bf16 %v1534, %v1533
        %v1566 = vpack.c.bf16 %v1536, %v1535
        %v1567 = vpack.c.bf16 %v1538, %v1537
        %v1568 = vpack.c.bf16 %v1540, %v1539
        %v1569 = vpack.c.bf16 %v1542, %v1541
        %v1570 = vpack.c.bf16 %v1544, %v1543
        %v1571 = vpack.c.bf16 %v1546, %v1545
        %v1572 = vpack.c.bf16 %v1548, %v1547
        %v1573 = vpack.c.bf16 %v1550, %v1549
        %v1574 = vpack.c.bf16 %v1552, %v1551
        %v1575 = vpack.c.bf16 %v1554, %v1553
        %v1576 = vpack.c.bf16 %v1556, %v1555
        %v1577 = vpack.c.bf16 %v1558, %v1557
        %v1578 = vpack.c.bf16 %v1560, %v1559
        %v1579 = vpack.c.bf16 %v1562, %v1561
        %v1580 = vpack.c.bf16 %v1564, %v1563
        %v1597 = vunpack.c.l.b16 %v1565
        %v1598 = vunpack.c.h.b16 %v1565
        %v1599 = vunpack.c.l.b16 %v1566
        %v1600 = vunpack.c.h.b16 %v1566
        %v1601 = vunpack.c.l.b16 %v1567
        %v1602 = vunpack.c.h.b16 %v1567
        %v1603 = vunpack.c.l.b16 %v1568
        %v1604 = vunpack.c.h.b16 %v1568
        %v1605 = vunpack.c.l.b16 %v1569
        %v1606 = vunpack.c.h.b16 %v1569
        %v1607 = vunpack.c.l.b16 %v1570
        %v1608 = vunpack.c.h.b16 %v1570
        %v1609 = vunpack.c.l.b16 %v1571
        %v1610 = vunpack.c.h.b16 %v1571
        %v1611 = vunpack.c.l.b16 %v1572
        %v1612 = vunpack.c.h.b16 %v1572
        %v1613 = vunpack.c.l.b16 %v1573
        %v1614 = vunpack.c.h.b16 %v1573
        %v1615 = vunpack.c.l.b16 %v1574
        %v1616 = vunpack.c.h.b16 %v1574
        %v1617 = vunpack.c.l.b16 %v1575
        %v1618 = vunpack.c.h.b16 %v1575
        %v1619 = vunpack.c.l.b16 %v1576
        %v1620 = vunpack.c.h.b16 %v1576
        %v1621 = vunpack.c.l.b16 %v1577
        %v1622 = vunpack.c.h.b16 %v1577
        %v1623 = vunpack.c.l.b16 %v1578
        %v1624 = vunpack.c.h.b16 %v1578
        %v1625 = vunpack.c.l.b16 %v1579
        %v1626 = vunpack.c.h.b16 %v1579
        %v1627 = vunpack.c.l.b16 %v1580
        %v1628 = vunpack.c.h.b16 %v1580
        %v1629 = vpack.c.b16 %v1597, %v1597
        %v1630 = vpack.c.b16 %v1598, %v1598
        %v1631 = vpack.c.b16 %v1599, %v1599
        %v1632 = vpack.c.b16 %v1600, %v1600
        %v1633 = vpack.c.b16 %v1601, %v1601
        %v1634 = vpack.c.b16 %v1602, %v1602
        %v1635 = vpack.c.b16 %v1603, %v1603
        %v1636 = vpack.c.b16 %v1604, %v1604
        %v1637 = vpack.c.b16 %v1605, %v1605
        %v1638 = vpack.c.b16 %v1606, %v1606
        %v1639 = vpack.c.b16 %v1607, %v1607
        %v1640 = vpack.c.b16 %v1608, %v1608
        %v1641 = vpack.c.b16 %v1609, %v1609
        %v1642 = vpack.c.b16 %v1610, %v1610
        %v1643 = vpack.c.b16 %v1611, %v1611
        %v1644 = vpack.c.b16 %v1612, %v1612
        %v1645 = vpack.c.b16 %v1613, %v1613
        %v1646 = vpack.c.b16 %v1614, %v1614
        %v1647 = vpack.c.b16 %v1615, %v1615
        %v1648 = vpack.c.b16 %v1616, %v1616
        %v1649 = vpack.c.b16 %v1617, %v1617
        %v1650 = vpack.c.b16 %v1618, %v1618
        %v1651 = vpack.c.b16 %v1619, %v1619
        %v1652 = vpack.c.b16 %v1620, %v1620
        %v1653 = vpack.c.b16 %v1621, %v1621
        %v1654 = vpack.c.b16 %v1622, %v1622
        %v1655 = vpack.c.b16 %v1623, %v1623
        %v1656 = vpack.c.b16 %v1624, %v1624
        %v1657 = vpack.c.b16 %v1625, %v1625
        %v1658 = vpack.c.b16 %v1626, %v1626
        %v1659 = vpack.c.b16 %v1627, %v1627
        %v1660 = vpack.c.b16 %v1628, %v1628
        %1693 = vst [vmem:[%s220] sm:$0xf] %v1629
        %1694 = vst [vmem:[%s220 + $0x4] sm:$0xf] %v1630
        %1695 = vst [vmem:[%s220 + $0x8] sm:$0xf] %v1631
        %1696 = vst [vmem:[%s220 + $0xc] sm:$0xf] %v1632
        %1697 = vst [vmem:[%s220 + $0x10] sm:$0xf] %v1633
        %1698 = vst [vmem:[%s220 + $0x14] sm:$0xf] %v1634
        %1699 = vst [vmem:[%s220 + $0x18] sm:$0xf] %v1635
        %1700 = vst [vmem:[%s220 + $0x1c] sm:$0xf] %v1636
        %1701 = vst [vmem:[%s220 + $0x20] sm:$0xf] %v1637
        %1702 = vst [vmem:[%s220 + $0x24] sm:$0xf] %v1638
        %1703 = vst [vmem:[%s220 + $0x28] sm:$0xf] %v1639
        %1704 = vst [vmem:[%s220 + $0x2c] sm:$0xf] %v1640
        %1705 = vst [vmem:[%s220 + $0x30] sm:$0xf] %v1641
        %1706 = vst [vmem:[%s220 + $0x34] sm:$0xf] %v1642
        %1707 = vst [vmem:[%s220 + $0x38] sm:$0xf] %v1643
        %1708 = vst [vmem:[%s220 + $0x3c] sm:$0xf] %v1644
        %1709 = vst [vmem:[%s220 + $0x40] sm:$0xf] %v1645
        %1710 = vst [vmem:[%s220 + $0x44] sm:$0xf] %v1646
        %1711 = vst [vmem:[%s220 + $0x48] sm:$0xf] %v1647
        %1712 = vst [vmem:[%s220 + $0x4c] sm:$0xf] %v1648
        %1713 = vst [vmem:[%s220 + $0x50] sm:$0xf] %v1649
        %1714 = vst [vmem:[%s220 + $0x54] sm:$0xf] %v1650
        %1715 = vst [vmem:[%s220 + $0x58] sm:$0xf] %v1651
        %1716 = vst [vmem:[%s220 + $0x5c] sm:$0xf] %v1652
        %1717 = vst [vmem:[%s220 + $0x60] sm:$0xf] %v1653
        %1718 = vst [vmem:[%s220 + $0x64] sm:$0xf] %v1654
        %1719 = vst [vmem:[%s220 + $0x68] sm:$0xf] %v1655
        %1720 = vst [vmem:[%s220 + $0x6c] sm:$0xf] %v1656
        %1721 = vst [vmem:[%s220 + $0x70] sm:$0xf] %v1657
        %1722 = vst [vmem:[%s220 + $0x74] sm:$0xf] %v1658
        %1723 = vst [vmem:[%s220 + $0x78] sm:$0xf] %v1659
        %1724 = vst [vmem:[%s220 + $0x7c] sm:$0xf] %v1660
        %s1725 = sand.u32 %s128, 1
        %s1726 = scalar_lea.sflag [#allocation4], %s1725
        %s1727 = sand.u32 %s128, 1
        %s1728 = smul.addr %s1727, 128
        %s1729 = scalar_lea.vmem [#allocation3], %s1728
        // Predicated region
        $region33: #{tpu_custom_call.1} parent=31 // pred_check
          %p1730 = pneg %p138
        $region34: #{tpu_custom_call.1} parent=31 // pred_check_branch
          %1732 = sbr.rel (%p1730) target = $region36
        $region35: #{tpu_custom_call.1} parent=31 // pred_region
          %s1733 = smul.u32 32, %s23
          %s1735 = ssub.s32 2048, 2048
          %1736 = vsyncadd %s1726, %s1735
          %s1737 = sadd.s32 %s24, %s1733
          %s1738 = smul.addr %s22, 32
          %s1739 = sadd.s32 %s1737, %s1738
          %s1740 = smul.addr %s1739, 64
          %s1741 = scalar_lea.hbm %s3, %s1740
          %s1742 = sshll.u32 %s1729, 4
          %s1743 = int_to_ptr.vmem [resolvable:$true] %s1742
          %1748 = dma.vmem_to_hbm [thread:$0]  %s1743, 2048, %s1741, %s1726, 64, 64, 4
        $region36: #{tpu_custom_call.1} parent=31 // pred_fallthru
          _
      $region32: #{tpu_custom_call.1} parent=5 // pred_fallthru
        _
      %p1749 = scmp.le.s32.totalorder 2, %s12
      // Predicated region
      $region37: #{tpu_custom_call.1} parent=5 // pred_check
        %p1750 = pneg %p1749
      $region38: #{tpu_custom_call.1} parent=5 // pred_check_branch
        %1752 = sbr.rel (%p1750) target = $region40
      $region39: #{tpu_custom_call.1} parent=5 // pred_region
        %s1753 = ssub.s32 %s12, 2
        // Predicated region
        $region41: #{tpu_custom_call.1} parent=39 // pred_check
          %p1754 = pneg %p144
        $region42: #{tpu_custom_call.1} parent=39 // pred_check_branch
          %1756 = sbr.rel (%p1754) target = $region44
        $region43: #{tpu_custom_call.1} parent=39 // pred_region
          %s1757 = sand.u32 %s129, 1
          %s1758 = scalar_lea.sflag [#allocation4], %s1757
          %s1759 = sand.u32 %s129, 1
          %s1760 = smul.addr %s1759, 128
          %s1761 = scalar_lea.vmem [#allocation3], %s1760
          %1762 = dma.done %s1758, 2048
        $region44: #{tpu_custom_call.1} parent=39 // pred_fallthru
          _
      $region40: #{tpu_custom_call.1} parent=5 // pred_fallthru
        _
    $region6: #{tpu_custom_call.1} parent=1 // loop_footer
      %s16 = sadd.s32 1, %s12
    $region7: #{tpu_custom_call.1} parent=1 // loop_footer_branch
      %11 = sbr.rel target = $region3
    $region8: #{tpu_custom_call.1} parent=1 // loop_exit
      _
    %1763 = vsyncpa [#allocation4], 1
    %s1764 = scalar_lea.sflag [#allocation4], 1
    %1765 = vsyncpa %s1764, 1

</llo_original>
